<compile_context>
chip_gen: v6e
topology: v6e:2x2x1
jax: 0.10.0
libtpu: 0.0.40
codegen_flags: <defaults>
</compile_context>

<pallas_src>
import functools

import jax
import jax.numpy as jnp
from jax.experimental import pallas as pl
from jax.experimental.pallas import tpu as pltpu


def _multibox_kernel(conf_ref, loc_ref, lab_ref, gt_ref, out_ref, *,
                     neg_pos_ratio, p_actual):
    tb, num_classes, p_pad = conf_ref.shape

    conf = conf_ref[...].astype(jnp.float32)          # (TB, C, P) lanes = priors
    labels = lab_ref[...][:, 0, :]                    # (TB, P) int32

    # ---- log-softmax over the class (sublane) axis ---------------------------
    m = jnp.max(conf, axis=1, keepdims=True)          # (TB, 1, P)
    sh = conf - m
    lse = jnp.log(jnp.sum(jnp.exp(sh), axis=1, keepdims=True))
    logsm = sh - lse                                  # (TB, C, P)
    bg_loss = -logsm[:, 0, :]                         # (TB, P)  -log p(background)

    # ---- cross-entropy per prior, computed up-front so every (TB, C, P)
    # temporary is dead before the mining search ------------------------------
    class_iota = jax.lax.broadcasted_iota(jnp.int32, (tb, num_classes, p_pad), 1)
    onehot = (class_iota == labels[:, None, :]).astype(jnp.float32)
    ce_per = -jnp.sum(logsm * onehot, axis=1)         # (TB, P)

    # ---- positive mask (padded priors beyond p_actual are never valid) -------
    if p_actual < p_pad:
        lane = jax.lax.broadcasted_iota(jnp.int32, (tb, p_pad), 1)
        valid = lane < p_actual
        pos = (labels > 0) & valid
        excluded = pos | jnp.logical_not(valid)
    else:
        valid = None
        pos = labels > 0
        excluded = pos

    num_pos = jnp.sum(pos.astype(jnp.float32), axis=1, keepdims=True)   # (TB, 1)
    num_neg = num_pos * jnp.float32(neg_pos_ratio)                      # (TB, 1)

    # -1e30 is a safe stand-in for -inf: bg_loss >= 0 always, so excluded
    # entries can never out-rank a real negative.
    mining = jnp.where(excluded, jnp.float32(-1e30), bg_loss)           # (TB, P)

    # ---- hard-negative mining via exact per-row k-th-largest threshold -------
    # Monotone signed-int32 key: x < y  <=>  key(x) < key(y).
    bits = pltpu.bitcast(mining, jnp.int32)                             # (TB, P)
    key = jnp.where(bits < 0,
                    jnp.bitwise_xor(bits, jnp.int32(0x7FFFFFFF)),
                    bits)

    def count_ge(thr):                                                  # (TB, 1)
        return jnp.sum((key >= thr).astype(jnp.float32), axis=1, keepdims=True)

    # Bitwise binary search for the maximum threshold t with
    # count(key >= t) >= num_neg.  mask_neg = (key >= t) is then exactly
    # {i : rank_i < num_neg} with strict-greater rank, ties included.
    prefix = jnp.where(count_ge(jnp.int32(0)) >= num_neg,
                       jnp.int32(0), jnp.int32(-2 ** 31))               # sign bit
    for b in range(30, -1, -1):                                         # unrolled
        cand = prefix + jnp.int32(1 << b)
        prefix = jnp.where(count_ge(cand) >= num_neg, cand, prefix)

    mask_neg = (key >= prefix) & (num_neg > 0.0)                        # (TB, P)
    mask = pos | mask_neg
    if valid is not None:
        mask = mask & valid

    ce_sum = jnp.sum(jnp.where(mask, ce_per, 0.0))

    # ---- smooth-L1 regression loss over positive priors ----------------------
    d = loc_ref[...].astype(jnp.float32) - gt_ref[...].astype(jnp.float32)
    ad = jnp.abs(d)
    sl = jnp.where(ad < 1.0, 0.5 * d * d, ad - 0.5)                     # (TB, 4, P)
    sl_per = jnp.sum(sl, axis=1)                                        # (TB, P)
    sl_sum = jnp.sum(jnp.where(pos, sl_per, 0.0))

    np_sum = jnp.sum(num_pos)

    # Single (1, 8, 128) output tile per grid step: sublane 0 = smooth-L1 sum,
    # sublane 1 = CE sum, sublane 2 = num_pos (reduced in the JAX wrapper).
    row = jax.lax.broadcasted_iota(jnp.int32, out_ref.shape, 1)
    out_ref[...] = jnp.where(row == 0, sl_sum,
                   jnp.where(row == 1, ce_sum,
                   jnp.where(row == 2, np_sum, 0.0)))


def _round_up(x, m):
    return ((x + m - 1) // m) * m


def multibox_loss_pallas(confidence, predicted_locations, labels, gt_locations,
                         neg_pos_ratio):
    confidence = jnp.asarray(confidence, jnp.float32)
    predicted_locations = jnp.asarray(predicted_locations, jnp.float32)
    gt_locations = jnp.asarray(gt_locations, jnp.float32)
    labels = jnp.asarray(labels, jnp.int32)

    B, P, C = confidence.shape
    p_pad = _round_up(P, 128)

    # VMEM budget: ~75% of physical VMEM (headroom for compiler scratch and
    # double-buffered DMA); conservative 48 MiB fallback (v7x-safe).
    try:
        cap = int(pltpu.get_tpu_info().vmem_capacity_bytes)
    except Exception:
        cap = 64 << 20
    vmem_budget = (cap * 3) // 4

    # Batch rows per grid step.  Per-row footprint: double-buffered input
    # blocks + ~6 (C, P) f32 softmax/CE temporaries + ~16 (P,) f32 rows.
    per_row = p_pad * 4 * (2 * (C + 9) + 6 * C + 16)
    tb = max(1, min(B, int(vmem_budget * 0.6) // max(per_row, 1)))
    if tb >= 8:
        tb = (tb // 8) * 8          # full-sublane vregs for (TB, P) temporaries

    # Only split the batch across grid steps when the device actually has
    # multiple TensorCores (megacore); on single-TC chips a forced split just
    # halves TB and doubles per-step overhead.
    try:
        num_tc = int(getattr(jax.devices()[0], "num_cores", 1) or 1)
    except Exception:
        num_tc = 1
    if num_tc > 1 and B >= num_tc:
        tb = min(tb, -(-B // num_tc))

    b_pad = _round_up(B, tb)
    G = b_pad // tb

    # Lane-dense layouts (priors on lanes), padded to (b_pad, ., p_pad).
    # Padded rows/priors have label 0 and contribute exactly zero to all sums.
    conf_t = jnp.transpose(confidence, (0, 2, 1))          # (B, C, P)
    loc_t = jnp.transpose(predicted_locations, (0, 2, 1))  # (B, 4, P)
    gt_t = jnp.transpose(gt_locations, (0, 2, 1))          # (B, 4, P)
    lab_t = labels[:, None, :]                             # (B, 1, P)

    pad_b, pad_p = b_pad - B, p_pad - P
    if pad_b or pad_p:
        conf_t = jnp.pad(conf_t, ((0, pad_b), (0, 0), (0, pad_p)))
        loc_t = jnp.pad(loc_t, ((0, pad_b), (0, 0), (0, pad_p)))
        gt_t = jnp.pad(gt_t, ((0, pad_b), (0, 0), (0, pad_p)))
        lab_t = jnp.pad(lab_t, ((0, pad_b), (0, 0), (0, pad_p)))

    cost = pl.CostEstimate(
        flops=int(b_pad * p_pad * (10 * C + 32 * 3 + 40)),
        transcendentals=int(b_pad * p_pad * (C + 1)),
        bytes_accessed=int((conf_t.size + loc_t.size + gt_t.size + lab_t.size
                            + G * 8 * 128) * 4),
    )

    kernel = functools.partial(_multibox_kernel,
                               neg_pos_ratio=float(neg_pos_ratio),
                               p_actual=int(P))

    parts = pl.pallas_call(
        kernel,
        out_shape=jax.ShapeDtypeStruct((G, 8, 128), jnp.float32),
        grid_spec=pltpu.PrefetchScalarGridSpec(
            num_scalar_prefetch=0,
            grid=(G,),
            in_specs=[
                pl.BlockSpec((tb, C, p_pad), lambda g: (g, 0, 0)),  # confidence
                pl.BlockSpec((tb, 4, p_pad), lambda g: (g, 0, 0)),  # pred locations
                pl.BlockSpec((tb, 1, p_pad), lambda g: (g, 0, 0)),  # labels
                pl.BlockSpec((tb, 4, p_pad), lambda g: (g, 0, 0)),  # gt locations
            ],
            out_specs=pl.BlockSpec((1, 8, 128), lambda g: (g, 0, 0)),
        ),
        compiler_params=pltpu.CompilerParams(
            dimension_semantics=("parallel",),
            vmem_limit_bytes=int(vmem_budget)),
        cost_estimate=cost,
    )(conf_t, loc_t, lab_t, gt_t)

    sl_total = jnp.sum(parts[:, 0, 0])
    ce_total = jnp.sum(parts[:, 1, 0])
    num_pos = jnp.sum(parts[:, 2, 0]) + 1e-6
    # When no prior is selected anywhere both sums are 0, matching the PyTorch
    # degenerate branch that returns (0, 0).
    return sl_total / num_pos, ce_total / num_pos


class MultiboxLossPallas:
    """SSD Multibox loss. `priors`, iou_threshold, center/size variance are
    stored for API parity with the PyTorch module but unused in forward."""

    def __init__(self, priors, iou_threshold, neg_pos_ratio,
                 center_variance, size_variance):
        self.priors = priors
        self.iou_threshold = iou_threshold
        self.neg_pos_ratio = neg_pos_ratio
        self.center_variance = center_variance
        self.size_variance = size_variance

    def __call__(self, confidence, predicted_locations, labels, gt_locations):
        return multibox_loss_pallas(confidence, predicted_locations, labels,
                                    gt_locations, self.neg_pos_ratio)


def multibox_loss_ref(confidence, pred, labels, gt, neg_pos_ratio):
    """Pure-JAX reference. Rank uses strict-greater counting for ties (same as
    the kernel; torch.sort gives no stability guarantee either)."""
    B, P, C = confidence.shape
    logsm = jax.nn.log_softmax(confidence, axis=2)
    bg_loss = -logsm[:, :, 0]                               # (B, P)
    pos = labels > 0
    num_pos_row = jnp.sum(pos, axis=1, keepdims=True)
    num_neg = num_pos_row * neg_pos_ratio
    L = jnp.where(pos, -1e30, bg_loss)
    rank = jnp.sum(L[:, None, :] > L[:, :, None], axis=2)   # (B, P)
    mask = pos | (rank < num_neg)
    ce = -jnp.take_along_axis(logsm, labels[..., None], axis=2)[..., 0]
    ce_sum = jnp.sum(jnp.where(mask, ce, 0.0))
    d = pred - gt
    ad = jnp.abs(d)
    sl = jnp.where(ad < 1.0, 0.5 * d * d, ad - 0.5)
    sl_sum = jnp.sum(jnp.where(pos[..., None], sl, 0.0))
    npos = jnp.sum(pos).astype(jnp.float32) + 1e-6
    return sl_sum / npos, ce_sum / npos


if __name__ == "__main__":
    key = jax.random.PRNGKey(0)
    B, P, C = 2, 128, 8

    k1, k2, k3, k4 = jax.random.split(key, 4)
    confidence = jax.random.normal(k1, (B, P, C), dtype=jnp.float32)
    predicted_locations = jax.random.normal(k2, (B, P, 4), dtype=jnp.float32)
    gt_locations = jax.random.normal(k3, (B, P, 4), dtype=jnp.float32)
    # label 0 = background (negative); >0 = positive class
    labels = jax.random.randint(k4, (B, P), 0, C, dtype=jnp.int32)

    # Deterministic synthetic priors (unused in forward, kept for module parity).
    priors = jnp.stack(
        [jnp.linspace(0.0, 1.0, P)] * 4, axis=1).astype(jnp.float32)   # (P, 4)

    loss_mod = MultiboxLossPallas(priors, iou_threshold=0.5, neg_pos_ratio=3,
                                  center_variance=0.1, size_variance=0.2)

    reg_loss, cls_loss = loss_mod(confidence, predicted_locations,
                                  labels, gt_locations)
    reg_loss, cls_loss = jax.block_until_ready((reg_loss, cls_loss))

    reg_ref, cls_ref = multibox_loss_ref(confidence, predicted_locations,
                                         labels, gt_locations, 3)
    assert jnp.allclose(reg_loss, reg_ref, rtol=1e-3, atol=1e-3), (reg_loss, reg_ref)
    assert jnp.allclose(cls_loss, cls_ref, rtol=1e-3, atol=1e-3), (cls_loss, cls_ref)

    print("KERNEL_OK")
</pallas_src>

<mosaic_0001>
module attributes {stable_mosaic.version = 11 : i64} {
  func.func @_multibox_kernel(%arg0: i32, %arg1: memref<2x8x128xf32, #tpu.memory_space<vmem>>, %arg2: memref<2x4x128xf32, #tpu.memory_space<vmem>>, %arg3: memref<2x1x128xi32, #tpu.memory_space<vmem>>, %arg4: memref<2x4x128xf32, #tpu.memory_space<vmem>>, %arg5: memref<1x8x128xf32, #tpu.memory_space<vmem>>) attributes {dimension_semantics = [#tpu.dimension_semantics<parallel>], iteration_bounds = array<i64: 1>, scalar_prefetch = 0 : i64, scratch_operands = 0 : i64, tpu.core_type = #tpu.core_type<tc>, window_params = [{transform_indices = @transform_0, window_bounds = array<i64: 2, 8, 128>}, {transform_indices = @transform_1, window_bounds = array<i64: 2, 4, 128>}, {transform_indices = @transform_2, window_bounds = array<i64: 2, 1, 128>}, {transform_indices = @transform_3, window_bounds = array<i64: 2, 4, 128>}, {transform_indices = @transform_4, window_bounds = array<i64: 1, 8, 128>}]} {
    %c0 = arith.constant 0 : index
    %c0_0 = arith.constant 0 : index
    %c0_1 = arith.constant 0 : index
    %0 = vector.load %arg1[%c0, %c0_0, %c0_1] : memref<2x8x128xf32, #tpu.memory_space<vmem>>, vector<2x8x128xf32>
    %c0_2 = arith.constant 0 : index
    %c0_3 = arith.constant 0 : index
    %c0_4 = arith.constant 0 : index
    %1 = vector.load %arg3[%c0_2, %c0_3, %c0_4] : memref<2x1x128xi32, #tpu.memory_space<vmem>>, vector<2x1x128xi32>
    %2 = vector.shape_cast %1 : vector<2x1x128xi32> to vector<2x128xi32>
    %cst = arith.constant dense<0xFF800000> : vector<2x128xf32>
    %3 = vector.multi_reduction <maximumf>, %0, %cst [1] : vector<2x8x128xf32> to vector<2x128xf32>
    %4 = vector.shape_cast %3 : vector<2x128xf32> to vector<2x1x128xf32>
    %5 = vector.broadcast %4 : vector<2x1x128xf32> to vector<2x8x128xf32>
    %6 = arith.subf %0, %5 : vector<2x8x128xf32>
    %7 = math.exp %6 : vector<2x8x128xf32>
    %cst_5 = arith.constant dense<0.000000e+00> : vector<2x128xf32>
    %8 = vector.multi_reduction <add>, %7, %cst_5 [1] : vector<2x8x128xf32> to vector<2x128xf32>
    %9 = vector.shape_cast %8 : vector<2x128xf32> to vector<2x1x128xf32>
    %10 = math.log %9 : vector<2x1x128xf32>
    %11 = vector.broadcast %10 : vector<2x1x128xf32> to vector<2x8x128xf32>
    %12 = arith.subf %6, %11 : vector<2x8x128xf32>
    %13 = vector.extract_strided_slice %12 {offsets = [0, 0, 0], sizes = [2, 1, 128], strides = [1, 1, 1]} : vector<2x8x128xf32> to vector<2x1x128xf32>
    %14 = vector.shape_cast %13 : vector<2x1x128xf32> to vector<2x128xf32>
    %cst_6 = arith.constant 0.000000e+00 : f32
    %15 = vector.broadcast %cst_6 : f32 to vector<2x128xf32>
    %16 = arith.subf %15, %14 : vector<2x128xf32>
    %17 = tpu.iota {dimensions = array<i32: 1>} : vector<2x8x128xi32>
    %18 = vector.shape_cast %2 : vector<2x128xi32> to vector<2x1x128xi32>
    %19 = vector.broadcast %18 : vector<2x1x128xi32> to vector<2x8x128xi32>
    %20 = arith.cmpi eq, %17, %19 : vector<2x8x128xi32>
    %21 = arith.extui %20 : vector<2x8x128xi1> to vector<2x8x128xi32>
    %22 = arith.sitofp %21 : vector<2x8x128xi32> to vector<2x8x128xf32>
    %23 = arith.mulf %12, %22 : vector<2x8x128xf32>
    %cst_7 = arith.constant dense<0.000000e+00> : vector<2x128xf32>
    %24 = vector.multi_reduction <add>, %23, %cst_7 [1] : vector<2x8x128xf32> to vector<2x128xf32>
    %cst_8 = arith.constant 0.000000e+00 : f32
    %25 = vector.broadcast %cst_8 : f32 to vector<2x128xf32>
    %26 = arith.subf %25, %24 : vector<2x128xf32>
    %c0_i32 = arith.constant 0 : i32
    %27 = vector.broadcast %c0_i32 : i32 to vector<2x128xi32>
    %28 = arith.cmpi sgt, %2, %27 : vector<2x128xi32>
    %29 = arith.extui %28 : vector<2x128xi1> to vector<2x128xi32>
    %30 = arith.sitofp %29 : vector<2x128xi32> to vector<2x128xf32>
    %cst_9 = arith.constant dense<0.000000e+00> : vector<2xf32>
    %31 = vector.multi_reduction <add>, %30, %cst_9 [1] : vector<2x128xf32> to vector<2xf32>
    %32 = vector.shape_cast %31 : vector<2xf32> to vector<2x1xf32>
    %cst_10 = arith.constant 3.000000e+00 : f32
    %33 = vector.broadcast %cst_10 : f32 to vector<2x1xf32>
    %34 = arith.mulf %32, %33 : vector<2x1xf32>
    %cst_11 = arith.constant -1.000000e+30 : f32
    %35 = vector.broadcast %cst_11 : f32 to vector<2x128xf32>
    %36 = arith.select %28, %35, %16 : vector<2x128xi1>, vector<2x128xf32>
    %37 = tpu.bitcast %36 : vector<2x128xf32> -> vector<2x128xi32>
    %c0_i32_12 = arith.constant 0 : i32
    %38 = vector.broadcast %c0_i32_12 : i32 to vector<2x128xi32>
    %39 = arith.cmpi slt, %37, %38 : vector<2x128xi32>
    %c2147483647_i32 = arith.constant 2147483647 : i32
    %40 = vector.broadcast %c2147483647_i32 : i32 to vector<2x128xi32>
    %41 = arith.xori %37, %40 : vector<2x128xi32>
    %42 = arith.select %39, %41, %37 : vector<2x128xi1>, vector<2x128xi32>
    %c0_i32_13 = arith.constant 0 : i32
    %43 = vector.broadcast %c0_i32_13 : i32 to vector<2x128xi32>
    %44 = arith.cmpi sge, %42, %43 : vector<2x128xi32>
    %45 = arith.extui %44 : vector<2x128xi1> to vector<2x128xi32>
    %46 = arith.sitofp %45 : vector<2x128xi32> to vector<2x128xf32>
    %cst_14 = arith.constant dense<0.000000e+00> : vector<2xf32>
    %47 = vector.multi_reduction <add>, %46, %cst_14 [1] : vector<2x128xf32> to vector<2xf32>
    %48 = vector.shape_cast %47 : vector<2xf32> to vector<2x1xf32>
    %49 = arith.cmpf oge, %48, %34 : vector<2x1xf32>
    %c0_i32_15 = arith.constant 0 : i32
    %c-2147483648_i32 = arith.constant -2147483648 : i32
    %50 = vector.broadcast %c0_i32_15 : i32 to vector<2x1xi32>
    %51 = vector.broadcast %c-2147483648_i32 : i32 to vector<2x1xi32>
    %52 = arith.select %49, %50, %51 : vector<2x1xi1>, vector<2x1xi32>
    %c1073741824_i32 = arith.constant 1073741824 : i32
    %53 = vector.broadcast %c1073741824_i32 : i32 to vector<2x1xi32>
    %54 = arith.addi %52, %53 : vector<2x1xi32>
    %55 = vector.broadcast %54 : vector<2x1xi32> to vector<2x128xi32>
    %56 = arith.cmpi sge, %42, %55 : vector<2x128xi32>
    %57 = arith.extui %56 : vector<2x128xi1> to vector<2x128xi32>
    %58 = arith.sitofp %57 : vector<2x128xi32> to vector<2x128xf32>
    %cst_16 = arith.constant dense<0.000000e+00> : vector<2xf32>
    %59 = vector.multi_reduction <add>, %58, %cst_16 [1] : vector<2x128xf32> to vector<2xf32>
    %60 = vector.shape_cast %59 : vector<2xf32> to vector<2x1xf32>
    %61 = arith.cmpf oge, %60, %34 : vector<2x1xf32>
    %62 = arith.select %61, %54, %52 : vector<2x1xi1>, vector<2x1xi32>
    %c536870912_i32 = arith.constant 536870912 : i32
    %63 = vector.broadcast %c536870912_i32 : i32 to vector<2x1xi32>
    %64 = arith.addi %62, %63 : vector<2x1xi32>
    %65 = vector.broadcast %64 : vector<2x1xi32> to vector<2x128xi32>
    %66 = arith.cmpi sge, %42, %65 : vector<2x128xi32>
    %67 = arith.extui %66 : vector<2x128xi1> to vector<2x128xi32>
    %68 = arith.sitofp %67 : vector<2x128xi32> to vector<2x128xf32>
    %cst_17 = arith.constant dense<0.000000e+00> : vector<2xf32>
    %69 = vector.multi_reduction <add>, %68, %cst_17 [1] : vector<2x128xf32> to vector<2xf32>
    %70 = vector.shape_cast %69 : vector<2xf32> to vector<2x1xf32>
    %71 = arith.cmpf oge, %70, %34 : vector<2x1xf32>
    %72 = arith.select %71, %64, %62 : vector<2x1xi1>, vector<2x1xi32>
    %c268435456_i32 = arith.constant 268435456 : i32
    %73 = vector.broadcast %c268435456_i32 : i32 to vector<2x1xi32>
    %74 = arith.addi %72, %73 : vector<2x1xi32>
    %75 = vector.broadcast %74 : vector<2x1xi32> to vector<2x128xi32>
    %76 = arith.cmpi sge, %42, %75 : vector<2x128xi32>
    %77 = arith.extui %76 : vector<2x128xi1> to vector<2x128xi32>
    %78 = arith.sitofp %77 : vector<2x128xi32> to vector<2x128xf32>
    %cst_18 = arith.constant dense<0.000000e+00> : vector<2xf32>
    %79 = vector.multi_reduction <add>, %78, %cst_18 [1] : vector<2x128xf32> to vector<2xf32>
    %80 = vector.shape_cast %79 : vector<2xf32> to vector<2x1xf32>
    %81 = arith.cmpf oge, %80, %34 : vector<2x1xf32>
    %82 = arith.select %81, %74, %72 : vector<2x1xi1>, vector<2x1xi32>
    %c134217728_i32 = arith.constant 134217728 : i32
    %83 = vector.broadcast %c134217728_i32 : i32 to vector<2x1xi32>
    %84 = arith.addi %82, %83 : vector<2x1xi32>
    %85 = vector.broadcast %84 : vector<2x1xi32> to vector<2x128xi32>
    %86 = arith.cmpi sge, %42, %85 : vector<2x128xi32>
    %87 = arith.extui %86 : vector<2x128xi1> to vector<2x128xi32>
    %88 = arith.sitofp %87 : vector<2x128xi32> to vector<2x128xf32>
    %cst_19 = arith.constant dense<0.000000e+00> : vector<2xf32>
    %89 = vector.multi_reduction <add>, %88, %cst_19 [1] : vector<2x128xf32> to vector<2xf32>
    %90 = vector.shape_cast %89 : vector<2xf32> to vector<2x1xf32>
    %91 = arith.cmpf oge, %90, %34 : vector<2x1xf32>
    %92 = arith.select %91, %84, %82 : vector<2x1xi1>, vector<2x1xi32>
    %c67108864_i32 = arith.constant 67108864 : i32
    %93 = vector.broadcast %c67108864_i32 : i32 to vector<2x1xi32>
    %94 = arith.addi %92, %93 : vector<2x1xi32>
    %95 = vector.broadcast %94 : vector<2x1xi32> to vector<2x128xi32>
    %96 = arith.cmpi sge, %42, %95 : vector<2x128xi32>
    %97 = arith.extui %96 : vector<2x128xi1> to vector<2x128xi32>
    %98 = arith.sitofp %97 : vector<2x128xi32> to vector<2x128xf32>
    %cst_20 = arith.constant dense<0.000000e+00> : vector<2xf32>
    %99 = vector.multi_reduction <add>, %98, %cst_20 [1] : vector<2x128xf32> to vector<2xf32>
    %100 = vector.shape_cast %99 : vector<2xf32> to vector<2x1xf32>
    %101 = arith.cmpf oge, %100, %34 : vector<2x1xf32>
    %102 = arith.select %101, %94, %92 : vector<2x1xi1>, vector<2x1xi32>
    %c33554432_i32 = arith.constant 33554432 : i32
    %103 = vector.broadcast %c33554432_i32 : i32 to vector<2x1xi32>
    %104 = arith.addi %102, %103 : vector<2x1xi32>
    %105 = vector.broadcast %104 : vector<2x1xi32> to vector<2x128xi32>
    %106 = arith.cmpi sge, %42, %105 : vector<2x128xi32>
    %107 = arith.extui %106 : vector<2x128xi1> to vector<2x128xi32>
    %108 = arith.sitofp %107 : vector<2x128xi32> to vector<2x128xf32>
    %cst_21 = arith.constant dense<0.000000e+00> : vector<2xf32>
    %109 = vector.multi_reduction <add>, %108, %cst_21 [1] : vector<2x128xf32> to vector<2xf32>
    %110 = vector.shape_cast %109 : vector<2xf32> to vector<2x1xf32>
    %111 = arith.cmpf oge, %110, %34 : vector<2x1xf32>
    %112 = arith.select %111, %104, %102 : vector<2x1xi1>, vector<2x1xi32>
    %c16777216_i32 = arith.constant 16777216 : i32
    %113 = vector.broadcast %c16777216_i32 : i32 to vector<2x1xi32>
    %114 = arith.addi %112, %113 : vector<2x1xi32>
    %115 = vector.broadcast %114 : vector<2x1xi32> to vector<2x128xi32>
    %116 = arith.cmpi sge, %42, %115 : vector<2x128xi32>
    %117 = arith.extui %116 : vector<2x128xi1> to vector<2x128xi32>
    %118 = arith.sitofp %117 : vector<2x128xi32> to vector<2x128xf32>
    %cst_22 = arith.constant dense<0.000000e+00> : vector<2xf32>
    %119 = vector.multi_reduction <add>, %118, %cst_22 [1] : vector<2x128xf32> to vector<2xf32>
    %120 = vector.shape_cast %119 : vector<2xf32> to vector<2x1xf32>
    %121 = arith.cmpf oge, %120, %34 : vector<2x1xf32>
    %122 = arith.select %121, %114, %112 : vector<2x1xi1>, vector<2x1xi32>
    %c8388608_i32 = arith.constant 8388608 : i32
    %123 = vector.broadcast %c8388608_i32 : i32 to vector<2x1xi32>
    %124 = arith.addi %122, %123 : vector<2x1xi32>
    %125 = vector.broadcast %124 : vector<2x1xi32> to vector<2x128xi32>
    %126 = arith.cmpi sge, %42, %125 : vector<2x128xi32>
    %127 = arith.extui %126 : vector<2x128xi1> to vector<2x128xi32>
    %128 = arith.sitofp %127 : vector<2x128xi32> to vector<2x128xf32>
    %cst_23 = arith.constant dense<0.000000e+00> : vector<2xf32>
    %129 = vector.multi_reduction <add>, %128, %cst_23 [1] : vector<2x128xf32> to vector<2xf32>
    %130 = vector.shape_cast %129 : vector<2xf32> to vector<2x1xf32>
    %131 = arith.cmpf oge, %130, %34 : vector<2x1xf32>
    %132 = arith.select %131, %124, %122 : vector<2x1xi1>, vector<2x1xi32>
    %c4194304_i32 = arith.constant 4194304 : i32
    %133 = vector.broadcast %c4194304_i32 : i32 to vector<2x1xi32>
    %134 = arith.addi %132, %133 : vector<2x1xi32>
    %135 = vector.broadcast %134 : vector<2x1xi32> to vector<2x128xi32>
    %136 = arith.cmpi sge, %42, %135 : vector<2x128xi32>
    %137 = arith.extui %136 : vector<2x128xi1> to vector<2x128xi32>
    %138 = arith.sitofp %137 : vector<2x128xi32> to vector<2x128xf32>
    %cst_24 = arith.constant dense<0.000000e+00> : vector<2xf32>
    %139 = vector.multi_reduction <add>, %138, %cst_24 [1] : vector<2x128xf32> to vector<2xf32>
    %140 = vector.shape_cast %139 : vector<2xf32> to vector<2x1xf32>
    %141 = arith.cmpf oge, %140, %34 : vector<2x1xf32>
    %142 = arith.select %141, %134, %132 : vector<2x1xi1>, vector<2x1xi32>
    %c2097152_i32 = arith.constant 2097152 : i32
    %143 = vector.broadcast %c2097152_i32 : i32 to vector<2x1xi32>
    %144 = arith.addi %142, %143 : vector<2x1xi32>
    %145 = vector.broadcast %144 : vector<2x1xi32> to vector<2x128xi32>
    %146 = arith.cmpi sge, %42, %145 : vector<2x128xi32>
    %147 = arith.extui %146 : vector<2x128xi1> to vector<2x128xi32>
    %148 = arith.sitofp %147 : vector<2x128xi32> to vector<2x128xf32>
    %cst_25 = arith.constant dense<0.000000e+00> : vector<2xf32>
    %149 = vector.multi_reduction <add>, %148, %cst_25 [1] : vector<2x128xf32> to vector<2xf32>
    %150 = vector.shape_cast %149 : vector<2xf32> to vector<2x1xf32>
    %151 = arith.cmpf oge, %150, %34 : vector<2x1xf32>
    %152 = arith.select %151, %144, %142 : vector<2x1xi1>, vector<2x1xi32>
    %c1048576_i32 = arith.constant 1048576 : i32
    %153 = vector.broadcast %c1048576_i32 : i32 to vector<2x1xi32>
    %154 = arith.addi %152, %153 : vector<2x1xi32>
    %155 = vector.broadcast %154 : vector<2x1xi32> to vector<2x128xi32>
    %156 = arith.cmpi sge, %42, %155 : vector<2x128xi32>
    %157 = arith.extui %156 : vector<2x128xi1> to vector<2x128xi32>
    %158 = arith.sitofp %157 : vector<2x128xi32> to vector<2x128xf32>
    %cst_26 = arith.constant dense<0.000000e+00> : vector<2xf32>
    %159 = vector.multi_reduction <add>, %158, %cst_26 [1] : vector<2x128xf32> to vector<2xf32>
    %160 = vector.shape_cast %159 : vector<2xf32> to vector<2x1xf32>
    %161 = arith.cmpf oge, %160, %34 : vector<2x1xf32>
    %162 = arith.select %161, %154, %152 : vector<2x1xi1>, vector<2x1xi32>
    %c524288_i32 = arith.constant 524288 : i32
    %163 = vector.broadcast %c524288_i32 : i32 to vector<2x1xi32>
    %164 = arith.addi %162, %163 : vector<2x1xi32>
    %165 = vector.broadcast %164 : vector<2x1xi32> to vector<2x128xi32>
    %166 = arith.cmpi sge, %42, %165 : vector<2x128xi32>
    %167 = arith.extui %166 : vector<2x128xi1> to vector<2x128xi32>
    %168 = arith.sitofp %167 : vector<2x128xi32> to vector<2x128xf32>
    %cst_27 = arith.constant dense<0.000000e+00> : vector<2xf32>
    %169 = vector.multi_reduction <add>, %168, %cst_27 [1] : vector<2x128xf32> to vector<2xf32>
    %170 = vector.shape_cast %169 : vector<2xf32> to vector<2x1xf32>
    %171 = arith.cmpf oge, %170, %34 : vector<2x1xf32>
    %172 = arith.select %171, %164, %162 : vector<2x1xi1>, vector<2x1xi32>
    %c262144_i32 = arith.constant 262144 : i32
    %173 = vector.broadcast %c262144_i32 : i32 to vector<2x1xi32>
    %174 = arith.addi %172, %173 : vector<2x1xi32>
    %175 = vector.broadcast %174 : vector<2x1xi32> to vector<2x128xi32>
    %176 = arith.cmpi sge, %42, %175 : vector<2x128xi32>
    %177 = arith.extui %176 : vector<2x128xi1> to vector<2x128xi32>
    %178 = arith.sitofp %177 : vector<2x128xi32> to vector<2x128xf32>
    %cst_28 = arith.constant dense<0.000000e+00> : vector<2xf32>
    %179 = vector.multi_reduction <add>, %178, %cst_28 [1] : vector<2x128xf32> to vector<2xf32>
    %180 = vector.shape_cast %179 : vector<2xf32> to vector<2x1xf32>
    %181 = arith.cmpf oge, %180, %34 : vector<2x1xf32>
    %182 = arith.select %181, %174, %172 : vector<2x1xi1>, vector<2x1xi32>
    %c131072_i32 = arith.constant 131072 : i32
    %183 = vector.broadcast %c131072_i32 : i32 to vector<2x1xi32>
    %184 = arith.addi %182, %183 : vector<2x1xi32>
    %185 = vector.broadcast %184 : vector<2x1xi32> to vector<2x128xi32>
    %186 = arith.cmpi sge, %42, %185 : vector<2x128xi32>
    %187 = arith.extui %186 : vector<2x128xi1> to vector<2x128xi32>
    %188 = arith.sitofp %187 : vector<2x128xi32> to vector<2x128xf32>
    %cst_29 = arith.constant dense<0.000000e+00> : vector<2xf32>
    %189 = vector.multi_reduction <add>, %188, %cst_29 [1] : vector<2x128xf32> to vector<2xf32>
    %190 = vector.shape_cast %189 : vector<2xf32> to vector<2x1xf32>
    %191 = arith.cmpf oge, %190, %34 : vector<2x1xf32>
    %192 = arith.select %191, %184, %182 : vector<2x1xi1>, vector<2x1xi32>
    %c65536_i32 = arith.constant 65536 : i32
    %193 = vector.broadcast %c65536_i32 : i32 to vector<2x1xi32>
    %194 = arith.addi %192, %193 : vector<2x1xi32>
    %195 = vector.broadcast %194 : vector<2x1xi32> to vector<2x128xi32>
    %196 = arith.cmpi sge, %42, %195 : vector<2x128xi32>
    %197 = arith.extui %196 : vector<2x128xi1> to vector<2x128xi32>
    %198 = arith.sitofp %197 : vector<2x128xi32> to vector<2x128xf32>
    %cst_30 = arith.constant dense<0.000000e+00> : vector<2xf32>
    %199 = vector.multi_reduction <add>, %198, %cst_30 [1] : vector<2x128xf32> to vector<2xf32>
    %200 = vector.shape_cast %199 : vector<2xf32> to vector<2x1xf32>
    %201 = arith.cmpf oge, %200, %34 : vector<2x1xf32>
    %202 = arith.select %201, %194, %192 : vector<2x1xi1>, vector<2x1xi32>
    %c32768_i32 = arith.constant 32768 : i32
    %203 = vector.broadcast %c32768_i32 : i32 to vector<2x1xi32>
    %204 = arith.addi %202, %203 : vector<2x1xi32>
    %205 = vector.broadcast %204 : vector<2x1xi32> to vector<2x128xi32>
    %206 = arith.cmpi sge, %42, %205 : vector<2x128xi32>
    %207 = arith.extui %206 : vector<2x128xi1> to vector<2x128xi32>
    %208 = arith.sitofp %207 : vector<2x128xi32> to vector<2x128xf32>
    %cst_31 = arith.constant dense<0.000000e+00> : vector<2xf32>
    %209 = vector.multi_reduction <add>, %208, %cst_31 [1] : vector<2x128xf32> to vector<2xf32>
    %210 = vector.shape_cast %209 : vector<2xf32> to vector<2x1xf32>
    %211 = arith.cmpf oge, %210, %34 : vector<2x1xf32>
    %212 = arith.select %211, %204, %202 : vector<2x1xi1>, vector<2x1xi32>
    %c16384_i32 = arith.constant 16384 : i32
    %213 = vector.broadcast %c16384_i32 : i32 to vector<2x1xi32>
    %214 = arith.addi %212, %213 : vector<2x1xi32>
    %215 = vector.broadcast %214 : vector<2x1xi32> to vector<2x128xi32>
    %216 = arith.cmpi sge, %42, %215 : vector<2x128xi32>
    %217 = arith.extui %216 : vector<2x128xi1> to vector<2x128xi32>
    %218 = arith.sitofp %217 : vector<2x128xi32> to vector<2x128xf32>
    %cst_32 = arith.constant dense<0.000000e+00> : vector<2xf32>
    %219 = vector.multi_reduction <add>, %218, %cst_32 [1] : vector<2x128xf32> to vector<2xf32>
    %220 = vector.shape_cast %219 : vector<2xf32> to vector<2x1xf32>
    %221 = arith.cmpf oge, %220, %34 : vector<2x1xf32>
    %222 = arith.select %221, %214, %212 : vector<2x1xi1>, vector<2x1xi32>
    %c8192_i32 = arith.constant 8192 : i32
    %223 = vector.broadcast %c8192_i32 : i32 to vector<2x1xi32>
    %224 = arith.addi %222, %223 : vector<2x1xi32>
    %225 = vector.broadcast %224 : vector<2x1xi32> to vector<2x128xi32>
    %226 = arith.cmpi sge, %42, %225 : vector<2x128xi32>
    %227 = arith.extui %226 : vector<2x128xi1> to vector<2x128xi32>
    %228 = arith.sitofp %227 : vector<2x128xi32> to vector<2x128xf32>
    %cst_33 = arith.constant dense<0.000000e+00> : vector<2xf32>
    %229 = vector.multi_reduction <add>, %228, %cst_33 [1] : vector<2x128xf32> to vector<2xf32>
    %230 = vector.shape_cast %229 : vector<2xf32> to vector<2x1xf32>
    %231 = arith.cmpf oge, %230, %34 : vector<2x1xf32>
    %232 = arith.select %231, %224, %222 : vector<2x1xi1>, vector<2x1xi32>
    %c4096_i32 = arith.constant 4096 : i32
    %233 = vector.broadcast %c4096_i32 : i32 to vector<2x1xi32>
    %234 = arith.addi %232, %233 : vector<2x1xi32>
    %235 = vector.broadcast %234 : vector<2x1xi32> to vector<2x128xi32>
    %236 = arith.cmpi sge, %42, %235 : vector<2x128xi32>
    %237 = arith.extui %236 : vector<2x128xi1> to vector<2x128xi32>
    %238 = arith.sitofp %237 : vector<2x128xi32> to vector<2x128xf32>
    %cst_34 = arith.constant dense<0.000000e+00> : vector<2xf32>
    %239 = vector.multi_reduction <add>, %238, %cst_34 [1] : vector<2x128xf32> to vector<2xf32>
    %240 = vector.shape_cast %239 : vector<2xf32> to vector<2x1xf32>
    %241 = arith.cmpf oge, %240, %34 : vector<2x1xf32>
    %242 = arith.select %241, %234, %232 : vector<2x1xi1>, vector<2x1xi32>
    %c2048_i32 = arith.constant 2048 : i32
    %243 = vector.broadcast %c2048_i32 : i32 to vector<2x1xi32>
    %244 = arith.addi %242, %243 : vector<2x1xi32>
    %245 = vector.broadcast %244 : vector<2x1xi32> to vector<2x128xi32>
    %246 = arith.cmpi sge, %42, %245 : vector<2x128xi32>
    %247 = arith.extui %246 : vector<2x128xi1> to vector<2x128xi32>
    %248 = arith.sitofp %247 : vector<2x128xi32> to vector<2x128xf32>
    %cst_35 = arith.constant dense<0.000000e+00> : vector<2xf32>
    %249 = vector.multi_reduction <add>, %248, %cst_35 [1] : vector<2x128xf32> to vector<2xf32>
    %250 = vector.shape_cast %249 : vector<2xf32> to vector<2x1xf32>
    %251 = arith.cmpf oge, %250, %34 : vector<2x1xf32>
    %252 = arith.select %251, %244, %242 : vector<2x1xi1>, vector<2x1xi32>
    %c1024_i32 = arith.constant 1024 : i32
    %253 = vector.broadcast %c1024_i32 : i32 to vector<2x1xi32>
    %254 = arith.addi %252, %253 : vector<2x1xi32>
    %255 = vector.broadcast %254 : vector<2x1xi32> to vector<2x128xi32>
    %256 = arith.cmpi sge, %42, %255 : vector<2x128xi32>
    %257 = arith.extui %256 : vector<2x128xi1> to vector<2x128xi32>
    %258 = arith.sitofp %257 : vector<2x128xi32> to vector<2x128xf32>
    %cst_36 = arith.constant dense<0.000000e+00> : vector<2xf32>
    %259 = vector.multi_reduction <add>, %258, %cst_36 [1] : vector<2x128xf32> to vector<2xf32>
    %260 = vector.shape_cast %259 : vector<2xf32> to vector<2x1xf32>
    %261 = arith.cmpf oge, %260, %34 : vector<2x1xf32>
    %262 = arith.select %261, %254, %252 : vector<2x1xi1>, vector<2x1xi32>
    %c512_i32 = arith.constant 512 : i32
    %263 = vector.broadcast %c512_i32 : i32 to vector<2x1xi32>
    %264 = arith.addi %262, %263 : vector<2x1xi32>
    %265 = vector.broadcast %264 : vector<2x1xi32> to vector<2x128xi32>
    %266 = arith.cmpi sge, %42, %265 : vector<2x128xi32>
    %267 = arith.extui %266 : vector<2x128xi1> to vector<2x128xi32>
    %268 = arith.sitofp %267 : vector<2x128xi32> to vector<2x128xf32>
    %cst_37 = arith.constant dense<0.000000e+00> : vector<2xf32>
    %269 = vector.multi_reduction <add>, %268, %cst_37 [1] : vector<2x128xf32> to vector<2xf32>
    %270 = vector.shape_cast %269 : vector<2xf32> to vector<2x1xf32>
    %271 = arith.cmpf oge, %270, %34 : vector<2x1xf32>
    %272 = arith.select %271, %264, %262 : vector<2x1xi1>, vector<2x1xi32>
    %c256_i32 = arith.constant 256 : i32
    %273 = vector.broadcast %c256_i32 : i32 to vector<2x1xi32>
    %274 = arith.addi %272, %273 : vector<2x1xi32>
    %275 = vector.broadcast %274 : vector<2x1xi32> to vector<2x128xi32>
    %276 = arith.cmpi sge, %42, %275 : vector<2x128xi32>
    %277 = arith.extui %276 : vector<2x128xi1> to vector<2x128xi32>
    %278 = arith.sitofp %277 : vector<2x128xi32> to vector<2x128xf32>
    %cst_38 = arith.constant dense<0.000000e+00> : vector<2xf32>
    %279 = vector.multi_reduction <add>, %278, %cst_38 [1] : vector<2x128xf32> to vector<2xf32>
    %280 = vector.shape_cast %279 : vector<2xf32> to vector<2x1xf32>
    %281 = arith.cmpf oge, %280, %34 : vector<2x1xf32>
    %282 = arith.select %281, %274, %272 : vector<2x1xi1>, vector<2x1xi32>
    %c128_i32 = arith.constant 128 : i32
    %283 = vector.broadcast %c128_i32 : i32 to vector<2x1xi32>
    %284 = arith.addi %282, %283 : vector<2x1xi32>
    %285 = vector.broadcast %284 : vector<2x1xi32> to vector<2x128xi32>
    %286 = arith.cmpi sge, %42, %285 : vector<2x128xi32>
    %287 = arith.extui %286 : vector<2x128xi1> to vector<2x128xi32>
    %288 = arith.sitofp %287 : vector<2x128xi32> to vector<2x128xf32>
    %cst_39 = arith.constant dense<0.000000e+00> : vector<2xf32>
    %289 = vector.multi_reduction <add>, %288, %cst_39 [1] : vector<2x128xf32> to vector<2xf32>
    %290 = vector.shape_cast %289 : vector<2xf32> to vector<2x1xf32>
    %291 = arith.cmpf oge, %290, %34 : vector<2x1xf32>
    %292 = arith.select %291, %284, %282 : vector<2x1xi1>, vector<2x1xi32>
    %c64_i32 = arith.constant 64 : i32
    %293 = vector.broadcast %c64_i32 : i32 to vector<2x1xi32>
    %294 = arith.addi %292, %293 : vector<2x1xi32>
    %295 = vector.broadcast %294 : vector<2x1xi32> to vector<2x128xi32>
    %296 = arith.cmpi sge, %42, %295 : vector<2x128xi32>
    %297 = arith.extui %296 : vector<2x128xi1> to vector<2x128xi32>
    %298 = arith.sitofp %297 : vector<2x128xi32> to vector<2x128xf32>
    %cst_40 = arith.constant dense<0.000000e+00> : vector<2xf32>
    %299 = vector.multi_reduction <add>, %298, %cst_40 [1] : vector<2x128xf32> to vector<2xf32>
    %300 = vector.shape_cast %299 : vector<2xf32> to vector<2x1xf32>
    %301 = arith.cmpf oge, %300, %34 : vector<2x1xf32>
    %302 = arith.select %301, %294, %292 : vector<2x1xi1>, vector<2x1xi32>
    %c32_i32 = arith.constant 32 : i32
    %303 = vector.broadcast %c32_i32 : i32 to vector<2x1xi32>
    %304 = arith.addi %302, %303 : vector<2x1xi32>
    %305 = vector.broadcast %304 : vector<2x1xi32> to vector<2x128xi32>
    %306 = arith.cmpi sge, %42, %305 : vector<2x128xi32>
    %307 = arith.extui %306 : vector<2x128xi1> to vector<2x128xi32>
    %308 = arith.sitofp %307 : vector<2x128xi32> to vector<2x128xf32>
    %cst_41 = arith.constant dense<0.000000e+00> : vector<2xf32>
    %309 = vector.multi_reduction <add>, %308, %cst_41 [1] : vector<2x128xf32> to vector<2xf32>
    %310 = vector.shape_cast %309 : vector<2xf32> to vector<2x1xf32>
    %311 = arith.cmpf oge, %310, %34 : vector<2x1xf32>
    %312 = arith.select %311, %304, %302 : vector<2x1xi1>, vector<2x1xi32>
    %c16_i32 = arith.constant 16 : i32
    %313 = vector.broadcast %c16_i32 : i32 to vector<2x1xi32>
    %314 = arith.addi %312, %313 : vector<2x1xi32>
    %315 = vector.broadcast %314 : vector<2x1xi32> to vector<2x128xi32>
    %316 = arith.cmpi sge, %42, %315 : vector<2x128xi32>
    %317 = arith.extui %316 : vector<2x128xi1> to vector<2x128xi32>
    %318 = arith.sitofp %317 : vector<2x128xi32> to vector<2x128xf32>
    %cst_42 = arith.constant dense<0.000000e+00> : vector<2xf32>
    %319 = vector.multi_reduction <add>, %318, %cst_42 [1] : vector<2x128xf32> to vector<2xf32>
    %320 = vector.shape_cast %319 : vector<2xf32> to vector<2x1xf32>
    %321 = arith.cmpf oge, %320, %34 : vector<2x1xf32>
    %322 = arith.select %321, %314, %312 : vector<2x1xi1>, vector<2x1xi32>
    %c8_i32 = arith.constant 8 : i32
    %323 = vector.broadcast %c8_i32 : i32 to vector<2x1xi32>
    %324 = arith.addi %322, %323 : vector<2x1xi32>
    %325 = vector.broadcast %324 : vector<2x1xi32> to vector<2x128xi32>
    %326 = arith.cmpi sge, %42, %325 : vector<2x128xi32>
    %327 = arith.extui %326 : vector<2x128xi1> to vector<2x128xi32>
    %328 = arith.sitofp %327 : vector<2x128xi32> to vector<2x128xf32>
    %cst_43 = arith.constant dense<0.000000e+00> : vector<2xf32>
    %329 = vector.multi_reduction <add>, %328, %cst_43 [1] : vector<2x128xf32> to vector<2xf32>
    %330 = vector.shape_cast %329 : vector<2xf32> to vector<2x1xf32>
    %331 = arith.cmpf oge, %330, %34 : vector<2x1xf32>
    %332 = arith.select %331, %324, %322 : vector<2x1xi1>, vector<2x1xi32>
    %c4_i32 = arith.constant 4 : i32
    %333 = vector.broadcast %c4_i32 : i32 to vector<2x1xi32>
    %334 = arith.addi %332, %333 : vector<2x1xi32>
    %335 = vector.broadcast %334 : vector<2x1xi32> to vector<2x128xi32>
    %336 = arith.cmpi sge, %42, %335 : vector<2x128xi32>
    %337 = arith.extui %336 : vector<2x128xi1> to vector<2x128xi32>
    %338 = arith.sitofp %337 : vector<2x128xi32> to vector<2x128xf32>
    %cst_44 = arith.constant dense<0.000000e+00> : vector<2xf32>
    %339 = vector.multi_reduction <add>, %338, %cst_44 [1] : vector<2x128xf32> to vector<2xf32>
    %340 = vector.shape_cast %339 : vector<2xf32> to vector<2x1xf32>
    %341 = arith.cmpf oge, %340, %34 : vector<2x1xf32>
    %342 = arith.select %341, %334, %332 : vector<2x1xi1>, vector<2x1xi32>
    %c2_i32 = arith.constant 2 : i32
    %343 = vector.broadcast %c2_i32 : i32 to vector<2x1xi32>
    %344 = arith.addi %342, %343 : vector<2x1xi32>
    %345 = vector.broadcast %344 : vector<2x1xi32> to vector<2x128xi32>
    %346 = arith.cmpi sge, %42, %345 : vector<2x128xi32>
    %347 = arith.extui %346 : vector<2x128xi1> to vector<2x128xi32>
    %348 = arith.sitofp %347 : vector<2x128xi32> to vector<2x128xf32>
    %cst_45 = arith.constant dense<0.000000e+00> : vector<2xf32>
    %349 = vector.multi_reduction <add>, %348, %cst_45 [1] : vector<2x128xf32> to vector<2xf32>
    %350 = vector.shape_cast %349 : vector<2xf32> to vector<2x1xf32>
    %351 = arith.cmpf oge, %350, %34 : vector<2x1xf32>
    %352 = arith.select %351, %344, %342 : vector<2x1xi1>, vector<2x1xi32>
    %c1_i32 = arith.constant 1 : i32
    %353 = vector.broadcast %c1_i32 : i32 to vector<2x1xi32>
    %354 = arith.addi %352, %353 : vector<2x1xi32>
    %355 = vector.broadcast %354 : vector<2x1xi32> to vector<2x128xi32>
    %356 = arith.cmpi sge, %42, %355 : vector<2x128xi32>
    %357 = arith.extui %356 : vector<2x128xi1> to vector<2x128xi32>
    %358 = arith.sitofp %357 : vector<2x128xi32> to vector<2x128xf32>
    %cst_46 = arith.constant dense<0.000000e+00> : vector<2xf32>
    %359 = vector.multi_reduction <add>, %358, %cst_46 [1] : vector<2x128xf32> to vector<2xf32>
    %360 = vector.shape_cast %359 : vector<2xf32> to vector<2x1xf32>
    %361 = arith.cmpf oge, %360, %34 : vector<2x1xf32>
    %362 = arith.select %361, %354, %352 : vector<2x1xi1>, vector<2x1xi32>
    %363 = vector.broadcast %362 : vector<2x1xi32> to vector<2x128xi32>
    %364 = arith.cmpi sge, %42, %363 : vector<2x128xi32>
    %cst_47 = arith.constant 0.000000e+00 : f32
    %365 = vector.broadcast %cst_47 : f32 to vector<2x1xf32>
    %366 = arith.cmpf ogt, %34, %365 : vector<2x1xf32>
    %367 = vector.broadcast %366 : vector<2x1xi1> to vector<2x128xi1>
    %368 = arith.andi %364, %367 : vector<2x128xi1>
    %369 = arith.ori %28, %368 : vector<2x128xi1>
    %cst_48 = arith.constant 0.000000e+00 : f32
    %370 = vector.broadcast %cst_48 : f32 to vector<2x128xf32>
    %371 = arith.select %369, %26, %370 : vector<2x128xi1>, vector<2x128xf32>
    %372 = vector.shape_cast %371 : vector<2x128xf32> to vector<1x2x128xf32>
    %cst_49 = arith.constant dense<0.000000e+00> : vector<1xf32>
    %373 = vector.multi_reduction <add>, %372, %cst_49 [1, 2] : vector<1x2x128xf32> to vector<1xf32>
    %374 = vector.shape_cast %373 : vector<1xf32> to vector<1x1x1xf32>
    %375 = vector.extract %374[0, 0, 0] : f32 from vector<1x1x1xf32>
    %c0_50 = arith.constant 0 : index
    %c0_51 = arith.constant 0 : index
    %c0_52 = arith.constant 0 : index
    %376 = vector.load %arg2[%c0_50, %c0_51, %c0_52] : memref<2x4x128xf32, #tpu.memory_space<vmem>>, vector<2x4x128xf32>
    %c0_53 = arith.constant 0 : index
    %c0_54 = arith.constant 0 : index
    %c0_55 = arith.constant 0 : index
    %377 = vector.load %arg4[%c0_53, %c0_54, %c0_55] : memref<2x4x128xf32, #tpu.memory_space<vmem>>, vector<2x4x128xf32>
    %378 = arith.subf %376, %377 : vector<2x4x128xf32>
    %379 = math.absf %378 : vector<2x4x128xf32>
    %cst_56 = arith.constant 1.000000e+00 : f32
    %380 = vector.broadcast %cst_56 : f32 to vector<2x4x128xf32>
    %381 = arith.cmpf olt, %379, %380 : vector<2x4x128xf32>
    %cst_57 = arith.constant 5.000000e-01 : f32
    %382 = vector.broadcast %cst_57 : f32 to vector<2x4x128xf32>
    %383 = arith.mulf %382, %378 : vector<2x4x128xf32>
    %384 = arith.mulf %383, %378 : vector<2x4x128xf32>
    %cst_58 = arith.constant 5.000000e-01 : f32
    %385 = vector.broadcast %cst_58 : f32 to vector<2x4x128xf32>
    %386 = arith.subf %379, %385 : vector<2x4x128xf32>
    %387 = arith.select %381, %384, %386 : vector<2x4x128xi1>, vector<2x4x128xf32>
    %cst_59 = arith.constant dense<0.000000e+00> : vector<2x128xf32>
    %388 = vector.multi_reduction <add>, %387, %cst_59 [1] : vector<2x4x128xf32> to vector<2x128xf32>
    %cst_60 = arith.constant 0.000000e+00 : f32
    %389 = vector.broadcast %cst_60 : f32 to vector<2x128xf32>
    %390 = arith.select %28, %388, %389 : vector<2x128xi1>, vector<2x128xf32>
    %391 = vector.shape_cast %390 : vector<2x128xf32> to vector<1x2x128xf32>
    %cst_61 = arith.constant dense<0.000000e+00> : vector<1xf32>
    %392 = vector.multi_reduction <add>, %391, %cst_61 [1, 2] : vector<1x2x128xf32> to vector<1xf32>
    %393 = vector.shape_cast %392 : vector<1xf32> to vector<1x1x1xf32>
    %394 = vector.extract %393[0, 0, 0] : f32 from vector<1x1x1xf32>
    %395 = vector.shape_cast %32 : vector<2x1xf32> to vector<1x2x1xf32>
    %cst_62 = arith.constant dense<0.000000e+00> : vector<1xf32>
    %396 = vector.multi_reduction <add>, %395, %cst_62 [1, 2] : vector<1x2x1xf32> to vector<1xf32>
    %397 = vector.shape_cast %396 : vector<1xf32> to vector<1x1x1xf32>
    %398 = vector.extract %397[0, 0, 0] : f32 from vector<1x1x1xf32>
    %399 = tpu.iota {dimensions = array<i32: 1>} : vector<1x8x128xi32>
    %c0_i32_63 = arith.constant 0 : i32
    %400 = vector.broadcast %c0_i32_63 : i32 to vector<1x8x128xi32>
    %401 = arith.cmpi eq, %399, %400 : vector<1x8x128xi32>
    %c1_i32_64 = arith.constant 1 : i32
    %402 = vector.broadcast %c1_i32_64 : i32 to vector<1x8x128xi32>
    %403 = arith.cmpi eq, %399, %402 : vector<1x8x128xi32>
    %c2_i32_65 = arith.constant 2 : i32
    %404 = vector.broadcast %c2_i32_65 : i32 to vector<1x8x128xi32>
    %405 = arith.cmpi eq, %399, %404 : vector<1x8x128xi32>
    %cst_66 = arith.constant 0.000000e+00 : f32
    %406 = vector.broadcast %398 : f32 to vector<1x8x128xf32>
    %407 = vector.broadcast %cst_66 : f32 to vector<1x8x128xf32>
    %408 = arith.select %405, %406, %407 : vector<1x8x128xi1>, vector<1x8x128xf32>
    %409 = vector.broadcast %375 : f32 to vector<1x8x128xf32>
    %410 = arith.select %403, %409, %408 : vector<1x8x128xi1>, vector<1x8x128xf32>
    %411 = vector.broadcast %394 : f32 to vector<1x8x128xf32>
    %412 = arith.select %401, %411, %410 : vector<1x8x128xi1>, vector<1x8x128xf32>
    %c0_67 = arith.constant 0 : index
    %c0_68 = arith.constant 0 : index
    %c0_69 = arith.constant 0 : index
    %413 = vector.load %arg5[%c0_67, %c0_68, %c0_69] : memref<1x8x128xf32, #tpu.memory_space<vmem>>, vector<1x8x128xf32>
    tpu.vector_store %arg5[%c0_67, %c0_68, %c0_69], %412 {strides = array<i32>} : memref<1x8x128xf32, #tpu.memory_space<vmem>>, vector<1x8x128xf32>,
    return
  }
  func.func @transform_0(%arg0: i32) -> (i32, i32, i32) {
    %c0_i32 = arith.constant 0 : i32
    %c0_i32_0 = arith.constant 0 : i32
    %c0_i32_1 = arith.constant 0 : i32
    return %arg0, %c0_i32, %c0_i32_0 : i32, i32, i32
  }
  func.func @transform_1(%arg0: i32) -> (i32, i32, i32) {
    %c0_i32 = arith.constant 0 : i32
    %c0_i32_0 = arith.constant 0 : i32
    %c0_i32_1 = arith.constant 0 : i32
    return %arg0, %c0_i32, %c0_i32_0 : i32, i32, i32
  }
  func.func @transform_2(%arg0: i32) -> (i32, i32, i32) {
    %c0_i32 = arith.constant 0 : i32
    %c0_i32_0 = arith.constant 0 : i32
    %c0_i32_1 = arith.constant 0 : i32
    return %arg0, %c0_i32, %c0_i32_0 : i32, i32, i32
  }
  func.func @transform_3(%arg0: i32) -> (i32, i32, i32) {
    %c0_i32 = arith.constant 0 : i32
    %c0_i32_0 = arith.constant 0 : i32
    %c0_i32_1 = arith.constant 0 : i32
    return %arg0, %c0_i32, %c0_i32_0 : i32, i32, i32
  }
  func.func @transform_4(%arg0: i32) -> (i32, i32, i32) {
    %c0_i32 = arith.constant 0 : i32
    %c0_i32_0 = arith.constant 0 : i32
    %c0_i32_1 = arith.constant 0 : i32
    return %arg0, %c0_i32, %c0_i32_0 : i32, i32, i32
  }
}

</mosaic_0001>

<llo_original>
// kernel: tpu_custom_call.1
$region0: #{tpu_custom_call.1}
  #allocation0 [shape = 'u32[]', space=smem, size = 0x4, offset = 0x4, fixed_abs, tag = 'smem constant byte address 0x4 - core index']
  #allocation1 [shape = 'u32[144,128]{1,0:T(1,128)}', space=vmem, size = 0x12000, scoped, tag = 'internal scratch']
  %s0 = inlined_call_operand.hbm [shape: f32[2,8,128], index: 0, kind: input, shape index: {}]
  %s1 = inlined_call_operand.hbm [shape: f32[2,4,128], index: 1, kind: input, shape index: {}]
  %s2 = inlined_call_operand.vmem [shape: s32[2,1,128], index: 2, kind: input, shape index: {}]
  %s3 = inlined_call_operand.hbm [shape: f32[2,4,128], index: 3, kind: input, shape index: {}]
  %s4 = inlined_call_operand.hbm [shape: f32[1,8,128], index: 4, kind: output, shape index: {}]
  %s5 = sld [smem:[#allocation0]]
  $region38: #{tpu_custom_call.1} parent=0
    _
  %s7 = ssub.s32 1, %s5
  %s8 = scalar_select 0, %s7, %s5
  $region1: #{tpu_custom_call.1} parent=0
    #allocation2 [shape = 'u8[8192]{0}', space=vmem, size = 0x2000, scoped, tag = 'input window, operand 0, single buffered']
    #allocation3 [shape = 's32[1]{0}', space=sflag, size = 0x4, scoped, tag = 'scoped memory for tpu_custom_call.1']
    #allocation4 [shape = 's32[1]{0}', space=sflag, size = 0x4, scoped, tag = 'scoped memory for tpu_custom_call.1']
    #allocation5 [shape = 'u8[4096]{0}', space=vmem, size = 0x1000, scoped, tag = 'input window, operand 1, single buffered']
    #allocation6 [shape = 's32[1]{0}', space=sflag, size = 0x4, scoped, tag = 'scoped memory for tpu_custom_call.1']
    #allocation7 [shape = 'u8[4096]{0}', space=vmem, size = 0x1000, scoped, tag = 'input window, operand 3, single buffered']
    #allocation8 [shape = 'u8[4096]{0}', space=vmem, size = 0x1000, scoped, tag = 'output window, operand 0, single buffered']
    %9 = vsyncpa [#allocation3], 0
    %10 = vsyncpa [#allocation6], 0
    %11 = vsyncpa [#allocation4], 0
    // Predicated region
    $region2: #{tpu_custom_call.1} parent=1 // pred_check
      _
    $region3: #{tpu_custom_call.1} parent=1 // pred_check_branch
      %13 = sbr.rel (0) target = $region5
    $region4: #{tpu_custom_call.1} parent=1 // pred_region
      %s15 = ssub.s32 256, 256
      %16 = vsyncadd [#allocation3], %s15
      %s17 = sshll.u32 [#allocation2], 4
      %s18 = int_to_ptr.vmem [resolvable:$true] %s17
      %23 = dma.hbm_to_vmem [thread:$0]  %s0, 256, %s18, [#allocation3], 128, 128, 8
    $region5: #{tpu_custom_call.1} parent=1 // pred_fallthru
      _
    // Predicated region
    $region6: #{tpu_custom_call.1} parent=1 // pred_check
      _
    $region7: #{tpu_custom_call.1} parent=1 // pred_check_branch
      %25 = sbr.rel (0) target = $region9
    $region8: #{tpu_custom_call.1} parent=1 // pred_region
      %s27 = ssub.s32 128, 128
      %28 = vsyncadd [#allocation6], %s27
      %s29 = sshll.u32 [#allocation5], 4
      %s30 = int_to_ptr.vmem [resolvable:$true] %s29
      %35 = dma.hbm_to_vmem [thread:$0]  %s1, 128, %s30, [#allocation6], 64, 64, 4
    $region9: #{tpu_custom_call.1} parent=1 // pred_fallthru
      _
    // Predicated region
    $region10: #{tpu_custom_call.1} parent=1 // pred_check
      _
    $region11: #{tpu_custom_call.1} parent=1 // pred_check_branch
      %37 = sbr.rel (0) target = $region13
    $region12: #{tpu_custom_call.1} parent=1 // pred_region
      _
    $region13: #{tpu_custom_call.1} parent=1 // pred_fallthru
      _
    // Predicated region
    $region14: #{tpu_custom_call.1} parent=1 // pred_check
      _
    $region15: #{tpu_custom_call.1} parent=1 // pred_check_branch
      %39 = sbr.rel (0) target = $region17
    $region16: #{tpu_custom_call.1} parent=1 // pred_region
      %s41 = ssub.s32 128, 128
      %42 = vsyncadd [#allocation6], %s41
      %s43 = sshll.u32 [#allocation7], 4
      %s44 = int_to_ptr.vmem [resolvable:$true] %s43
      %49 = dma.hbm_to_vmem [thread:$0]  %s3, 128, %s44, [#allocation6], 64, 64, 4
    $region17: #{tpu_custom_call.1} parent=1 // pred_fallthru
      _
    // Predicated region
    $region18: #{tpu_custom_call.1} parent=1 // pred_check
      _
    $region19: #{tpu_custom_call.1} parent=1 // pred_check_branch
      %51 = sbr.rel (0) target = $region21
    $region20: #{tpu_custom_call.1} parent=1 // pred_region
      %52 = dma.done [#allocation3], 256
    $region21: #{tpu_custom_call.1} parent=1 // pred_fallthru
      _
    // Predicated region
    $region22: #{tpu_custom_call.1} parent=1 // pred_check
      _
    $region23: #{tpu_custom_call.1} parent=1 // pred_check_branch
      %54 = sbr.rel (0) target = $region25
    $region24: #{tpu_custom_call.1} parent=1 // pred_region
      %55 = dma.done [#allocation6], 128
    $region25: #{tpu_custom_call.1} parent=1 // pred_fallthru
      _
    // Predicated region
    $region26: #{tpu_custom_call.1} parent=1 // pred_check
      _
    $region27: #{tpu_custom_call.1} parent=1 // pred_check_branch
      %57 = sbr.rel (0) target = $region29
    $region28: #{tpu_custom_call.1} parent=1 // pred_region
      %58 = dma.done [#allocation6], 128
    $region29: #{tpu_custom_call.1} parent=1 // pred_fallthru
      _
    %v59 = vld [vmem:[#allocation2] sm:$0xff]
    %v60 = vld [vmem:[#allocation2 + $0x8] sm:$0xff]
    %v61 = vld [vmem:[%s2] sm:$0x1]
    %v62 = vld [vmem:[%s2 + $0x1] sm:$0x1]
    %v63 = vrot.slane %v59, 4
    %v64 = vmax.f32 %v59, %v63
    %v65 = vrot.slane %v64, 2
    %v66 = vmax.f32 %v64, %v65
    %v67 = vrot.slane %v66, 1
    %v68 = vmax.f32 %v66, %v67
    %v69 = vrot.slane %v60, 4
    %v70 = vmax.f32 %v60, %v69
    %v71 = vrot.slane %v70, 2
    %v72 = vmax.f32 %v70, %v71
    %v73 = vrot.slane %v72, 1
    %v74 = vmax.f32 %v72, %v73
    %v75 = vsub.f32 %v59, %v68
    %v76 = vsub.f32 %v60, %v74
    %v77 = vmul.f32 %v75, 1.442695
    %v78 = vpow.pop %v77
    %v79 = vmul.f32 %v76, 1.442695
    %v80 = vpow.pop %v79
    %v81 = vrot.slane %v78, 4
    %v82 = vadd.f32 %v78, %v81
    %v83 = vrot.slane %v82, 2
    %v84 = vadd.f32 %v82, %v83
    %v85 = vrot.slane %v84, 1
    %v86 = vadd.f32 %v84, %v85
    %v87 = vrot.slane %v80, 4
    %v88 = vadd.f32 %v80, %v87
    %v89 = vrot.slane %v88, 2
    %v90 = vadd.f32 %v88, %v89
    %v91 = vrot.slane %v90, 1
    %v92 = vadd.f32 %v90, %v91
    %v93 = vlog2.pop %v86
    %v94 = vmul.f32 %v93, 0.6931472
    %v95 = vlog2.pop %v92
    %v96 = vmul.f32 %v95, 0.6931472
    %v97 = vsub.f32 %v75, %v94
    %v98 = vsub.f32 %v76, %v96
    %v99 = vsub.f32 0.0, %v97
    %v100 = vsub.f32 0.0, %v98
    %v101 = vlaneseq
    %v102 = vshrl.u32 %v101, 7
    %v103 = vlaneseq
    %v104 = vshrl.u32 %v103, 7
    %v105 = vsub.s32 0, %v104
    %v106 = vrot.slane %v61, %v105
    %v107 = vlaneseq
    %v108 = vshrl.u32 %v107, 7
    %v109 = vsub.s32 0, %v108
    %v110 = vrot.slane %v62, %v109
    %vm111 = vcmp.eq.s32.totalorder %v102, %v106
    %vm112 = vcmp.eq.s32.totalorder %v102, %v110
    %v113 = vsel %vm111, 1, 0
    %v114 = vsel %vm112, 1, 0
    %v115 = vcvt.s32.f32 %v113
    %v116 = vcvt.s32.f32 %v114
    %v117 = vmul.f32 %v97, %v115
    %v118 = vmul.f32 %v98, %v116
    %v119 = vrot.slane %v117, 4
    %v120 = vadd.f32 %v117, %v119
    %v121 = vrot.slane %v120, 2
    %v122 = vadd.f32 %v120, %v121
    %v123 = vrot.slane %v122, 1
    %v124 = vadd.f32 %v122, %v123
    %v125 = vrot.slane %v118, 4
    %v126 = vadd.f32 %v118, %v125
    %v127 = vrot.slane %v126, 2
    %v128 = vadd.f32 %v126, %v127
    %v129 = vrot.slane %v128, 1
    %v130 = vadd.f32 %v128, %v129
    %v131 = vsub.f32 0.0, %v124
    %v132 = vsub.f32 0.0, %v130
    %vm133 = vcmp.gt.s32.totalorder %v61, 0
    %vm134 = vcmp.gt.s32.totalorder %v62, 0
    %v135 = vsel %vm133, 1, 0
    %v136 = vsel %vm134, 1, 0
    %v137 = vcvt.s32.f32 %v135
    %v138 = vcvt.s32.f32 %v136
    %v141 = vcombine.low %v137, %v138
    %v143 = vunpack.c.l.s4 1966171168
    %v144 = vunpack.c.0.s8 %v143
    %v145 = vlaneseq
    %v146 = vshrl.u32 %v145, 7
    %v147 = vsub.s32 %v144, %v146
    %v148 = vrot.slane %v141, %v147
    %v150 = vunpack.c.l.s4 1966171168
    %v151 = vunpack.c.0.s8 %v150
    %v152 = vlaneseq
    %v153 = vshrl.u32 %v152, 7
    %v154 = vsub.s32 %v151, %v153
    %v155 = vrot.slane %v148, %v154
    %vm157 = vcmask 1041408
    %v158 = vsel %vm157, %v155, 0.0
    %159 = vadd.xlane.f32.xlu0 %v158
    %v160 = vpop.xlane.xlu0 %159
    %v161 = vmul.f32 %v160, 3.0
    %v162 = vsel %vm133, -1e+30, %v99
    %v163 = vsel %vm134, -1e+30, %v100
    %vm166 = vcmp.lt.s32.totalorder %v162, 0
    %vm167 = vcmp.lt.s32.totalorder %v163, 0
    %v168 = vxor.u32 %v162, 2147483647
    %v169 = vxor.u32 %v163, 2147483647
    %v170 = vsel %vm166, %v168, %v162
    %v171 = vsel %vm167, %v169, %v163
    %vm172 = vcmp.ge.s32.totalorder %v170, 0
    %vm173 = vcmp.ge.s32.totalorder %v171, 0
    %v174 = vsel %vm172, 1, 0
    %v175 = vsel %vm173, 1, 0
    %v176 = vcvt.s32.f32 %v174
    %v177 = vcvt.s32.f32 %v175
    %v180 = vrot.slane %v177, 7
    %vm181 = vcmask 1041409
    %v182 = vsel %vm181, %v180, %v176
    %v184 = vsel %vm157, %v182, 0.0
    %185 = vadd.xlane.f32.xlu0 %v184
    %v186 = vpop.xlane.xlu0 %185
    %vm187 = vcmp.ge.f32.partialorder %v186, %v161
    %v188 = vsel %vm187, 0, 2147483648
    %v189 = vadd.s32 %v188, 1073741824
    %v190 = vrot.slane %v189, 1
    %vm191 = vcmp.ge.s32.totalorder %v170, %v189
    %vm192 = vcmp.ge.s32.totalorder %v171, %v190
    %v193 = vsel %vm191, 1, 0
    %v194 = vsel %vm192, 1, 0
    %v195 = vcvt.s32.f32 %v193
    %v196 = vcvt.s32.f32 %v194
    %v199 = vrot.slane %v196, 7
    %v200 = vsel %vm181, %v199, %v195
    %v202 = vsel %vm157, %v200, 0.0
    %203 = vadd.xlane.f32.xlu0 %v202
    %v204 = vpop.xlane.xlu0 %203
    %vm205 = vcmp.ge.f32.partialorder %v204, %v161
    %v206 = vsel %vm205, %v189, %v188
    %v207 = vadd.s32 %v206, 536870912
    %v208 = vrot.slane %v207, 1
    %vm209 = vcmp.ge.s32.totalorder %v170, %v207
    %vm210 = vcmp.ge.s32.totalorder %v171, %v208
    %v211 = vsel %vm209, 1, 0
    %v212 = vsel %vm210, 1, 0
    %v213 = vcvt.s32.f32 %v211
    %v214 = vcvt.s32.f32 %v212
    %v217 = vrot.slane %v214, 7
    %v218 = vsel %vm181, %v217, %v213
    %v220 = vsel %vm157, %v218, 0.0
    %221 = vadd.xlane.f32.xlu0 %v220
    %v222 = vpop.xlane.xlu0 %221
    %vm223 = vcmp.ge.f32.partialorder %v222, %v161
    %v224 = vsel %vm223, %v207, %v206
    %v225 = vadd.s32 %v224, 268435456
    %v226 = vrot.slane %v225, 1
    %vm227 = vcmp.ge.s32.totalorder %v170, %v225
    %vm228 = vcmp.ge.s32.totalorder %v171, %v226
    %v229 = vsel %vm227, 1, 0
    %v230 = vsel %vm228, 1, 0
    %v231 = vcvt.s32.f32 %v229
    %v232 = vcvt.s32.f32 %v230
    %v235 = vrot.slane %v232, 7
    %v236 = vsel %vm181, %v235, %v231
    %v238 = vsel %vm157, %v236, 0.0
    %239 = vadd.xlane.f32.xlu0 %v238
    %v240 = vpop.xlane.xlu0 %239
    %vm241 = vcmp.ge.f32.partialorder %v240, %v161
    %v242 = vsel %vm241, %v225, %v224
    %v243 = vadd.s32 %v242, 134217728
    %v244 = vrot.slane %v243, 1
    %vm245 = vcmp.ge.s32.totalorder %v170, %v243
    %vm246 = vcmp.ge.s32.totalorder %v171, %v244
    %v247 = vsel %vm245, 1, 0
    %v248 = vsel %vm246, 1, 0
    %v249 = vcvt.s32.f32 %v247
    %v250 = vcvt.s32.f32 %v248
    %v253 = vrot.slane %v250, 7
    %v254 = vsel %vm181, %v253, %v249
    %v256 = vsel %vm157, %v254, 0.0
    %257 = vadd.xlane.f32.xlu0 %v256
    %v258 = vpop.xlane.xlu0 %257
    %vm259 = vcmp.ge.f32.partialorder %v258, %v161
    %v260 = vsel %vm259, %v243, %v242
    %v261 = vadd.s32 %v260, 67108864
    %v262 = vrot.slane %v261, 1
    %vm263 = vcmp.ge.s32.totalorder %v170, %v261
    %vm264 = vcmp.ge.s32.totalorder %v171, %v262
    %v265 = vsel %vm263, 1, 0
    %v266 = vsel %vm264, 1, 0
    %v267 = vcvt.s32.f32 %v265
    %v268 = vcvt.s32.f32 %v266
    %v271 = vrot.slane %v268, 7
    %v272 = vsel %vm181, %v271, %v267
    %v274 = vsel %vm157, %v272, 0.0
    %275 = vadd.xlane.f32.xlu0 %v274
    %v276 = vpop.xlane.xlu0 %275
    %vm277 = vcmp.ge.f32.partialorder %v276, %v161
    %v278 = vsel %vm277, %v261, %v260
    %v279 = vadd.s32 %v278, 33554432
    %v280 = vrot.slane %v279, 1
    %vm281 = vcmp.ge.s32.totalorder %v170, %v279
    %vm282 = vcmp.ge.s32.totalorder %v171, %v280
    %v283 = vsel %vm281, 1, 0
    %v284 = vsel %vm282, 1, 0
    %v285 = vcvt.s32.f32 %v283
    %v286 = vcvt.s32.f32 %v284
    %v289 = vrot.slane %v286, 7
    %v290 = vsel %vm181, %v289, %v285
    %v292 = vsel %vm157, %v290, 0.0
    %293 = vadd.xlane.f32.xlu0 %v292
    %v294 = vpop.xlane.xlu0 %293
    %vm295 = vcmp.ge.f32.partialorder %v294, %v161
    %v296 = vsel %vm295, %v279, %v278
    %v297 = vadd.s32 %v296, 16777216
    %v298 = vrot.slane %v297, 1
    %vm299 = vcmp.ge.s32.totalorder %v170, %v297
    %vm300 = vcmp.ge.s32.totalorder %v171, %v298
    %v301 = vsel %vm299, 1, 0
    %v302 = vsel %vm300, 1, 0
    %v303 = vcvt.s32.f32 %v301
    %v304 = vcvt.s32.f32 %v302
    %v307 = vrot.slane %v304, 7
    %v308 = vsel %vm181, %v307, %v303
    %v310 = vsel %vm157, %v308, 0.0
    %311 = vadd.xlane.f32.xlu0 %v310
    %v312 = vpop.xlane.xlu0 %311
    %vm313 = vcmp.ge.f32.partialorder %v312, %v161
    %v314 = vsel %vm313, %v297, %v296
    %v315 = vadd.s32 %v314, 8388608
    %v316 = vrot.slane %v315, 1
    %vm317 = vcmp.ge.s32.totalorder %v170, %v315
    %vm318 = vcmp.ge.s32.totalorder %v171, %v316
    %v319 = vsel %vm317, 1, 0
    %v320 = vsel %vm318, 1, 0
    %v321 = vcvt.s32.f32 %v319
    %v322 = vcvt.s32.f32 %v320
    %v325 = vrot.slane %v322, 7
    %v326 = vsel %vm181, %v325, %v321
    %v328 = vsel %vm157, %v326, 0.0
    %329 = vadd.xlane.f32.xlu0 %v328
    %v330 = vpop.xlane.xlu0 %329
    %vm331 = vcmp.ge.f32.partialorder %v330, %v161
    %v332 = vsel %vm331, %v315, %v314
    %v333 = vadd.s32 %v332, 4194304
    %v334 = vrot.slane %v333, 1
    %vm335 = vcmp.ge.s32.totalorder %v170, %v333
    %vm336 = vcmp.ge.s32.totalorder %v171, %v334
    %v337 = vsel %vm335, 1, 0
    %v338 = vsel %vm336, 1, 0
    %v339 = vcvt.s32.f32 %v337
    %v340 = vcvt.s32.f32 %v338
    %v343 = vrot.slane %v340, 7
    %v344 = vsel %vm181, %v343, %v339
    %v346 = vsel %vm157, %v344, 0.0
    %347 = vadd.xlane.f32.xlu0 %v346
    %v348 = vpop.xlane.xlu0 %347
    %vm349 = vcmp.ge.f32.partialorder %v348, %v161
    %v350 = vsel %vm349, %v333, %v332
    %v351 = vadd.s32 %v350, 2097152
    %v352 = vrot.slane %v351, 1
    %vm353 = vcmp.ge.s32.totalorder %v170, %v351
    %vm354 = vcmp.ge.s32.totalorder %v171, %v352
    %v355 = vsel %vm353, 1, 0
    %v356 = vsel %vm354, 1, 0
    %v357 = vcvt.s32.f32 %v355
    %v358 = vcvt.s32.f32 %v356
    %v361 = vrot.slane %v358, 7
    %v362 = vsel %vm181, %v361, %v357
    %v364 = vsel %vm157, %v362, 0.0
    %365 = vadd.xlane.f32.xlu0 %v364
    %v366 = vpop.xlane.xlu0 %365
    %vm367 = vcmp.ge.f32.partialorder %v366, %v161
    %v368 = vsel %vm367, %v351, %v350
    %v369 = vadd.s32 %v368, 1048576
    %v370 = vrot.slane %v369, 1
    %vm371 = vcmp.ge.s32.totalorder %v170, %v369
    %vm372 = vcmp.ge.s32.totalorder %v171, %v370
    %v373 = vsel %vm371, 1, 0
    %v374 = vsel %vm372, 1, 0
    %v375 = vcvt.s32.f32 %v373
    %v376 = vcvt.s32.f32 %v374
    %v379 = vrot.slane %v376, 7
    %v380 = vsel %vm181, %v379, %v375
    %v382 = vsel %vm157, %v380, 0.0
    %383 = vadd.xlane.f32.xlu0 %v382
    %v384 = vpop.xlane.xlu0 %383
    %vm385 = vcmp.ge.f32.partialorder %v384, %v161
    %v386 = vsel %vm385, %v369, %v368
    %v387 = vadd.s32 %v386, 524288
    %v388 = vrot.slane %v387, 1
    %vm389 = vcmp.ge.s32.totalorder %v170, %v387
    %vm390 = vcmp.ge.s32.totalorder %v171, %v388
    %v391 = vsel %vm389, 1, 0
    %v392 = vsel %vm390, 1, 0
    %v393 = vcvt.s32.f32 %v391
    %v394 = vcvt.s32.f32 %v392
    %v397 = vrot.slane %v394, 7
    %v398 = vsel %vm181, %v397, %v393
    %v400 = vsel %vm157, %v398, 0.0
    %401 = vadd.xlane.f32.xlu0 %v400
    %v402 = vpop.xlane.xlu0 %401
    %vm403 = vcmp.ge.f32.partialorder %v402, %v161
    %v404 = vsel %vm403, %v387, %v386
    %v405 = vadd.s32 %v404, 262144
    %v406 = vrot.slane %v405, 1
    %vm407 = vcmp.ge.s32.totalorder %v170, %v405
    %vm408 = vcmp.ge.s32.totalorder %v171, %v406
    %v409 = vsel %vm407, 1, 0
    %v410 = vsel %vm408, 1, 0
    %v411 = vcvt.s32.f32 %v409
    %v412 = vcvt.s32.f32 %v410
    %v415 = vrot.slane %v412, 7
    %v416 = vsel %vm181, %v415, %v411
    %v418 = vsel %vm157, %v416, 0.0
    %419 = vadd.xlane.f32.xlu0 %v418
    %v420 = vpop.xlane.xlu0 %419
    %vm421 = vcmp.ge.f32.partialorder %v420, %v161
    %v422 = vsel %vm421, %v405, %v404
    %v423 = vadd.s32 %v422, 131072
    %v424 = vrot.slane %v423, 1
    %vm425 = vcmp.ge.s32.totalorder %v170, %v423
    %vm426 = vcmp.ge.s32.totalorder %v171, %v424
    %v427 = vsel %vm425, 1, 0
    %v428 = vsel %vm426, 1, 0
    %v429 = vcvt.s32.f32 %v427
    %v430 = vcvt.s32.f32 %v428
    %v433 = vrot.slane %v430, 7
    %v434 = vsel %vm181, %v433, %v429
    %v436 = vsel %vm157, %v434, 0.0
    %437 = vadd.xlane.f32.xlu0 %v436
    %v438 = vpop.xlane.xlu0 %437
    %vm439 = vcmp.ge.f32.partialorder %v438, %v161
    %v440 = vsel %vm439, %v423, %v422
    %v441 = vadd.s32 %v440, 65536
    %v442 = vrot.slane %v441, 1
    %vm443 = vcmp.ge.s32.totalorder %v170, %v441
    %vm444 = vcmp.ge.s32.totalorder %v171, %v442
    %v445 = vsel %vm443, 1, 0
    %v446 = vsel %vm444, 1, 0
    %v447 = vcvt.s32.f32 %v445
    %v448 = vcvt.s32.f32 %v446
    %v451 = vrot.slane %v448, 7
    %v452 = vsel %vm181, %v451, %v447
    %v454 = vsel %vm157, %v452, 0.0
    %455 = vadd.xlane.f32.xlu0 %v454
    %v456 = vpop.xlane.xlu0 %455
    %vm457 = vcmp.ge.f32.partialorder %v456, %v161
    %v458 = vsel %vm457, %v441, %v440
    %v459 = vadd.s32 %v458, 32768
    %v460 = vrot.slane %v459, 1
    %vm461 = vcmp.ge.s32.totalorder %v170, %v459
    %vm462 = vcmp.ge.s32.totalorder %v171, %v460
    %v463 = vsel %vm461, 1, 0
    %v464 = vsel %vm462, 1, 0
    %v465 = vcvt.s32.f32 %v463
    %v466 = vcvt.s32.f32 %v464
    %v469 = vrot.slane %v466, 7
    %v470 = vsel %vm181, %v469, %v465
    %v472 = vsel %vm157, %v470, 0.0
    %473 = vadd.xlane.f32.xlu0 %v472
    %v474 = vpop.xlane.xlu0 %473
    %vm475 = vcmp.ge.f32.partialorder %v474, %v161
    %v476 = vsel %vm475, %v459, %v458
    %v477 = vadd.s32 %v476, 16384
    %v478 = vrot.slane %v477, 1
    %vm479 = vcmp.ge.s32.totalorder %v170, %v477
    %vm480 = vcmp.ge.s32.totalorder %v171, %v478
    %v481 = vsel %vm479, 1, 0
    %v482 = vsel %vm480, 1, 0
    %v483 = vcvt.s32.f32 %v481
    %v484 = vcvt.s32.f32 %v482
    %v487 = vrot.slane %v484, 7
    %v488 = vsel %vm181, %v487, %v483
    %v490 = vsel %vm157, %v488, 0.0
    %491 = vadd.xlane.f32.xlu0 %v490
    %v492 = vpop.xlane.xlu0 %491
    %vm493 = vcmp.ge.f32.partialorder %v492, %v161
    %v494 = vsel %vm493, %v477, %v476
    %v495 = vadd.s32 %v494, 8192
    %v496 = vrot.slane %v495, 1
    %vm497 = vcmp.ge.s32.totalorder %v170, %v495
    %vm498 = vcmp.ge.s32.totalorder %v171, %v496
    %v499 = vsel %vm497, 1, 0
    %v500 = vsel %vm498, 1, 0
    %v501 = vcvt.s32.f32 %v499
    %v502 = vcvt.s32.f32 %v500
    %v505 = vrot.slane %v502, 7
    %v506 = vsel %vm181, %v505, %v501
    %v508 = vsel %vm157, %v506, 0.0
    %509 = vadd.xlane.f32.xlu0 %v508
    %v510 = vpop.xlane.xlu0 %509
    %vm511 = vcmp.ge.f32.partialorder %v510, %v161
    %v512 = vsel %vm511, %v495, %v494
    %v513 = vadd.s32 %v512, 4096
    %v514 = vrot.slane %v513, 1
    %vm515 = vcmp.ge.s32.totalorder %v170, %v513
    %vm516 = vcmp.ge.s32.totalorder %v171, %v514
    %v517 = vsel %vm515, 1, 0
    %v518 = vsel %vm516, 1, 0
    %v519 = vcvt.s32.f32 %v517
    %v520 = vcvt.s32.f32 %v518
    %v523 = vrot.slane %v520, 7
    %v524 = vsel %vm181, %v523, %v519
    %v526 = vsel %vm157, %v524, 0.0
    %527 = vadd.xlane.f32.xlu0 %v526
    %v528 = vpop.xlane.xlu0 %527
    %vm529 = vcmp.ge.f32.partialorder %v528, %v161
    %v530 = vsel %vm529, %v513, %v512
    %v531 = vadd.s32 %v530, 2048
    %v532 = vrot.slane %v531, 1
    %vm533 = vcmp.ge.s32.totalorder %v170, %v531
    %vm534 = vcmp.ge.s32.totalorder %v171, %v532
    %v535 = vsel %vm533, 1, 0
    %v536 = vsel %vm534, 1, 0
    %v537 = vcvt.s32.f32 %v535
    %v538 = vcvt.s32.f32 %v536
    %v541 = vrot.slane %v538, 7
    %v542 = vsel %vm181, %v541, %v537
    %v544 = vsel %vm157, %v542, 0.0
    %545 = vadd.xlane.f32.xlu0 %v544
    %v546 = vpop.xlane.xlu0 %545
    %vm547 = vcmp.ge.f32.partialorder %v546, %v161
    %v548 = vsel %vm547, %v531, %v530
    %v549 = vadd.s32 %v548, 1024
    %v550 = vrot.slane %v549, 1
    %vm551 = vcmp.ge.s32.totalorder %v170, %v549
    %vm552 = vcmp.ge.s32.totalorder %v171, %v550
    %v553 = vsel %vm551, 1, 0
    %v554 = vsel %vm552, 1, 0
    %v555 = vcvt.s32.f32 %v553
    %v556 = vcvt.s32.f32 %v554
    %v559 = vrot.slane %v556, 7
    %v560 = vsel %vm181, %v559, %v555
    %v562 = vsel %vm157, %v560, 0.0
    %563 = vadd.xlane.f32.xlu0 %v562
    %v564 = vpop.xlane.xlu0 %563
    %vm565 = vcmp.ge.f32.partialorder %v564, %v161
    %v566 = vsel %vm565, %v549, %v548
    %v567 = vadd.s32 %v566, 512
    %v568 = vrot.slane %v567, 1
    %vm569 = vcmp.ge.s32.totalorder %v170, %v567
    %vm570 = vcmp.ge.s32.totalorder %v171, %v568
    %v571 = vsel %vm569, 1, 0
    %v572 = vsel %vm570, 1, 0
    %v573 = vcvt.s32.f32 %v571
    %v574 = vcvt.s32.f32 %v572
    %v577 = vrot.slane %v574, 7
    %v578 = vsel %vm181, %v577, %v573
    %v580 = vsel %vm157, %v578, 0.0
    %581 = vadd.xlane.f32.xlu0 %v580
    %v582 = vpop.xlane.xlu0 %581
    %vm583 = vcmp.ge.f32.partialorder %v582, %v161
    %v584 = vsel %vm583, %v567, %v566
    %v585 = vadd.s32 %v584, 256
    %v586 = vrot.slane %v585, 1
    %vm587 = vcmp.ge.s32.totalorder %v170, %v585
    %vm588 = vcmp.ge.s32.totalorder %v171, %v586
    %v589 = vsel %vm587, 1, 0
    %v590 = vsel %vm588, 1, 0
    %v591 = vcvt.s32.f32 %v589
    %v592 = vcvt.s32.f32 %v590
    %v595 = vrot.slane %v592, 7
    %v596 = vsel %vm181, %v595, %v591
    %v598 = vsel %vm157, %v596, 0.0
    %599 = vadd.xlane.f32.xlu0 %v598
    %v600 = vpop.xlane.xlu0 %599
    %vm601 = vcmp.ge.f32.partialorder %v600, %v161
    %v602 = vsel %vm601, %v585, %v584
    %v603 = vadd.s32 %v602, 128
    %v604 = vrot.slane %v603, 1
    %vm605 = vcmp.ge.s32.totalorder %v170, %v603
    %vm606 = vcmp.ge.s32.totalorder %v171, %v604
    %v607 = vsel %vm605, 1, 0
    %v608 = vsel %vm606, 1, 0
    %v609 = vcvt.s32.f32 %v607
    %v610 = vcvt.s32.f32 %v608
    %v613 = vrot.slane %v610, 7
    %v614 = vsel %vm181, %v613, %v609
    %v616 = vsel %vm157, %v614, 0.0
    %617 = vadd.xlane.f32.xlu0 %v616
    %v618 = vpop.xlane.xlu0 %617
    %vm619 = vcmp.ge.f32.partialorder %v618, %v161
    %v620 = vsel %vm619, %v603, %v602
    %v621 = vadd.s32 %v620, 64
    %v622 = vrot.slane %v621, 1
    %vm623 = vcmp.ge.s32.totalorder %v170, %v621
    %vm624 = vcmp.ge.s32.totalorder %v171, %v622
    %v625 = vsel %vm623, 1, 0
    %v626 = vsel %vm624, 1, 0
    %v627 = vcvt.s32.f32 %v625
    %v628 = vcvt.s32.f32 %v626
    %v631 = vrot.slane %v628, 7
    %v632 = vsel %vm181, %v631, %v627
    %v634 = vsel %vm157, %v632, 0.0
    %635 = vadd.xlane.f32.xlu0 %v634
    %v636 = vpop.xlane.xlu0 %635
    %vm637 = vcmp.ge.f32.partialorder %v636, %v161
    %v638 = vsel %vm637, %v621, %v620
    %v639 = vadd.s32 %v638, 32
    %v640 = vrot.slane %v639, 1
    %vm641 = vcmp.ge.s32.totalorder %v170, %v639
    %vm642 = vcmp.ge.s32.totalorder %v171, %v640
    %v643 = vsel %vm641, 1, 0
    %v644 = vsel %vm642, 1, 0
    %v645 = vcvt.s32.f32 %v643
    %v646 = vcvt.s32.f32 %v644
    %v649 = vrot.slane %v646, 7
    %v650 = vsel %vm181, %v649, %v645
    %v652 = vsel %vm157, %v650, 0.0
    %653 = vadd.xlane.f32.xlu0 %v652
    %v654 = vpop.xlane.xlu0 %653
    %vm655 = vcmp.ge.f32.partialorder %v654, %v161
    %v656 = vsel %vm655, %v639, %v638
    %v657 = vadd.s32 %v656, 16
    %v658 = vrot.slane %v657, 1
    %vm659 = vcmp.ge.s32.totalorder %v170, %v657
    %vm660 = vcmp.ge.s32.totalorder %v171, %v658
    %v661 = vsel %vm659, 1, 0
    %v662 = vsel %vm660, 1, 0
    %v663 = vcvt.s32.f32 %v661
    %v664 = vcvt.s32.f32 %v662
    %v667 = vrot.slane %v664, 7
    %v668 = vsel %vm181, %v667, %v663
    %v670 = vsel %vm157, %v668, 0.0
    %671 = vadd.xlane.f32.xlu0 %v670
    %v672 = vpop.xlane.xlu0 %671
    %vm673 = vcmp.ge.f32.partialorder %v672, %v161
    %v674 = vsel %vm673, %v657, %v656
    %v675 = vadd.s32 %v674, 8
    %v676 = vrot.slane %v675, 1
    %vm677 = vcmp.ge.s32.totalorder %v170, %v675
    %vm678 = vcmp.ge.s32.totalorder %v171, %v676
    %v679 = vsel %vm677, 1, 0
    %v680 = vsel %vm678, 1, 0
    %v681 = vcvt.s32.f32 %v679
    %v682 = vcvt.s32.f32 %v680
    %v685 = vrot.slane %v682, 7
    %v686 = vsel %vm181, %v685, %v681
    %v688 = vsel %vm157, %v686, 0.0
    %689 = vadd.xlane.f32.xlu0 %v688
    %v690 = vpop.xlane.xlu0 %689
    %vm691 = vcmp.ge.f32.partialorder %v690, %v161
    %v692 = vsel %vm691, %v675, %v674
    %v693 = vadd.s32 %v692, 4
    %v694 = vrot.slane %v693, 1
    %vm695 = vcmp.ge.s32.totalorder %v170, %v693
    %vm696 = vcmp.ge.s32.totalorder %v171, %v694
    %v697 = vsel %vm695, 1, 0
    %v698 = vsel %vm696, 1, 0
    %v699 = vcvt.s32.f32 %v697
    %v700 = vcvt.s32.f32 %v698
    %v703 = vrot.slane %v700, 7
    %v704 = vsel %vm181, %v703, %v699
    %v706 = vsel %vm157, %v704, 0.0
    %707 = vadd.xlane.f32.xlu0 %v706
    %v708 = vpop.xlane.xlu0 %707
    %vm709 = vcmp.ge.f32.partialorder %v708, %v161
    %v710 = vsel %vm709, %v693, %v692
    %v711 = vadd.s32 %v710, 2
    %v712 = vrot.slane %v711, 1
    %vm713 = vcmp.ge.s32.totalorder %v170, %v711
    %vm714 = vcmp.ge.s32.totalorder %v171, %v712
    %v715 = vsel %vm713, 1, 0
    %v716 = vsel %vm714, 1, 0
    %v717 = vcvt.s32.f32 %v715
    %v718 = vcvt.s32.f32 %v716
    %v721 = vrot.slane %v718, 7
    %v722 = vsel %vm181, %v721, %v717
    %v724 = vsel %vm157, %v722, 0.0
    %725 = vadd.xlane.f32.xlu0 %v724
    %v726 = vpop.xlane.xlu0 %725
    %vm727 = vcmp.ge.f32.partialorder %v726, %v161
    %v728 = vsel %vm727, %v711, %v710
    %v729 = vadd.s32 %v728, 1
    %v730 = vrot.slane %v729, 1
    %vm731 = vcmp.ge.s32.totalorder %v170, %v729
    %vm732 = vcmp.ge.s32.totalorder %v171, %v730
    %v733 = vsel %vm731, 1, 0
    %v734 = vsel %vm732, 1, 0
    %v735 = vcvt.s32.f32 %v733
    %v736 = vcvt.s32.f32 %v734
    %v739 = vrot.slane %v736, 7
    %v740 = vsel %vm181, %v739, %v735
    %v742 = vsel %vm157, %v740, 0.0
    %743 = vadd.xlane.f32.xlu0 %v742
    %v744 = vpop.xlane.xlu0 %743
    %vm745 = vcmp.ge.f32.partialorder %v744, %v161
    %v746 = vsel %vm745, %v729, %v728
    %v747 = vrot.slane %v746, 1
    %vm748 = vcmp.ge.s32.totalorder %v170, %v746
    %vm749 = vcmp.ge.s32.totalorder %v171, %v747
    %vm750 = vcmp.gt.f32.partialorder %v161, 0.0
    %v751 = vsel %vm750, 1, 0
    %vm752 = vcmp.eq.s32.totalorder %v751, 1
    %v753 = vsel %vm752, 1, 0
    %v754 = vrot.slane %v753, 1
    %vm755 = vcmp.ne.s32.totalorder %v753, 0
    %vm756 = vcmp.ne.s32.totalorder %v754, 0
    %vm757 = vmand %vm748, %vm755
    %vm758 = vmand %vm749, %vm756
    %vm759 = vmor %vm133, %vm757
    %vm760 = vmor %vm134, %vm758
    %v761 = vsel %vm759, %v131, 0.0
    %v762 = vsel %vm760, %v132, 0.0
    %v765 = vcombine.low %v761, %v762
    %v767 = vunpack.c.l.s4 1966171168
    %v768 = vunpack.c.0.s8 %v767
    %v769 = vlaneseq
    %v770 = vshrl.u32 %v769, 7
    %v771 = vsub.s32 %v768, %v770
    %v772 = vrot.slane %v765, %v771
    %v774 = vunpack.c.l.s4 1966171168
    %v775 = vunpack.c.0.s8 %v774
    %v776 = vlaneseq
    %v777 = vshrl.u32 %v776, 7
    %v778 = vsub.s32 %v775, %v777
    %v779 = vrot.slane %v772, %v778
    %v781 = vsel %vm157, %v779, 0.0
    %782 = vadd.xlane.f32.xlu0 %v781
    %v783 = vpop.xlane.xlu0 %782
    %v784 = vrot.slane %v783, 4
    %v785 = vadd.f32 %v783, %v784
    %v786 = vrot.slane %v785, 2
    %v787 = vadd.f32 %v785, %v786
    %v788 = vrot.slane %v787, 1
    %v789 = vadd.f32 %v787, %v788
    %s790 = vtos %v789
    %v791 = vld [vmem:[#allocation5] sm:$0xf]
    %v792 = vld [vmem:[#allocation5 + $0x4] sm:$0xf]
    %v793 = vld [vmem:[#allocation7] sm:$0xf]
    %v794 = vld [vmem:[#allocation7 + $0x4] sm:$0xf]
    %v795 = vsub.f32 %v791, %v793
    %v796 = vsub.f32 %v792, %v794
    %v797 = vand.u32 2147483647, %v795
    %v798 = vand.u32 2147483647, %v796
    %vm799 = vcmp.lt.f32.partialorder %v797, 1.0
    %vm800 = vcmp.lt.f32.partialorder %v798, 1.0
    %v801 = vmul.f32 %v795, 0.5
    %v802 = vmul.f32 %v796, 0.5
    %v803 = vmul.f32 %v801, %v795
    %v804 = vmul.f32 %v802, %v796
    %v805 = vsub.f32 %v797, 0.5
    %v806 = vsub.f32 %v798, 0.5
    %v807 = vsel %vm799, %v803, %v805
    %v808 = vsel %vm800, %v804, %v806
    %vm809 = vcmask 1043456
    %v810 = vsel %vm809, %v807, 0.0
    %v811 = vrot.slane %v810, 4
    %v812 = vadd.f32 %v810, %v811
    %v813 = vrot.slane %v812, 2
    %v814 = vadd.f32 %v812, %v813
    %v815 = vrot.slane %v814, 1
    %v816 = vadd.f32 %v814, %v815
    %v817 = vsel %vm809, %v808, 0.0
    %v818 = vrot.slane %v817, 4
    %v819 = vadd.f32 %v817, %v818
    %v820 = vrot.slane %v819, 2
    %v821 = vadd.f32 %v819, %v820
    %v822 = vrot.slane %v821, 1
    %v823 = vadd.f32 %v821, %v822
    %v824 = vsel %vm133, %v816, 0.0
    %v825 = vsel %vm134, %v823, 0.0
    %v828 = vcombine.low %v824, %v825
    %v830 = vunpack.c.l.s4 1966171168
    %v831 = vunpack.c.0.s8 %v830
    %v832 = vlaneseq
    %v833 = vshrl.u32 %v832, 7
    %v834 = vsub.s32 %v831, %v833
    %v835 = vrot.slane %v828, %v834
    %v837 = vunpack.c.l.s4 1966171168
    %v838 = vunpack.c.0.s8 %v837
    %v839 = vlaneseq
    %v840 = vshrl.u32 %v839, 7
    %v841 = vsub.s32 %v838, %v840
    %v842 = vrot.slane %v835, %v841
    %v844 = vsel %vm157, %v842, 0.0
    %845 = vadd.xlane.f32.xlu0 %v844
    %v846 = vpop.xlane.xlu0 %845
    %v847 = vrot.slane %v846, 4
    %v848 = vadd.f32 %v846, %v847
    %v849 = vrot.slane %v848, 2
    %v850 = vadd.f32 %v848, %v849
    %v851 = vrot.slane %v850, 1
    %v852 = vadd.f32 %v850, %v851
    %s853 = vtos %v852
    %vm854 = vcmask 1024
    %v855 = vsel %vm854, %v160, 0.0
    %856 = vadd.xlane.f32.xlu0 %v855
    %v857 = vpop.xlane.xlu0 %856
    %v858 = vrot.slane %v857, 4
    %v859 = vadd.f32 %v857, %v858
    %v860 = vrot.slane %v859, 2
    %v861 = vadd.f32 %v859, %v860
    %v862 = vrot.slane %v861, 1
    %v863 = vadd.f32 %v861, %v862
    %s864 = vtos %v863
    %vm865 = vcmp.eq.s32.totalorder %v102, 0
    %vm866 = vcmp.eq.s32.totalorder %v102, 1
    %vm867 = vcmp.eq.s32.totalorder %v102, 2
    %v868 = vstv %s864
    %v869 = vsel %vm867, %v868, 0.0
    %v870 = vstv %s790
    %v871 = vsel %vm866, %v870, %v869
    %v872 = vstv %s853
    %v873 = vsel %vm865, %v872, %v871
    %874 = vst [vmem:[#allocation8] sm:$0xff] %v873
    // Predicated region
    $region30: #{tpu_custom_call.1} parent=1 // pred_check
      _
    $region31: #{tpu_custom_call.1} parent=1 // pred_check_branch
      %876 = sbr.rel (0) target = $region33
    $region32: #{tpu_custom_call.1} parent=1 // pred_region
      %s878 = ssub.s32 128, 128
      %879 = vsyncadd [#allocation4], %s878
      %s881 = sshll.u32 [#allocation8], 4
      %s882 = int_to_ptr.vmem [resolvable:$true] %s881
      %884 = dma.vmem_to_hbm [thread:$0]  %s882, 128, %s4, [#allocation4]
    $region33: #{tpu_custom_call.1} parent=1 // pred_fallthru
      _
    // Predicated region
    $region34: #{tpu_custom_call.1} parent=1 // pred_check
      _
    $region35: #{tpu_custom_call.1} parent=1 // pred_check_branch
      %886 = sbr.rel (0) target = $region37
    $region36: #{tpu_custom_call.1} parent=1 // pred_region
      %887 = dma.done [#allocation4], 128
    $region37: #{tpu_custom_call.1} parent=1 // pred_fallthru
      _
    %888 = vsyncpa [#allocation3], 1
    %889 = vsyncpa [#allocation6], 1
    %890 = vsyncpa [#allocation4], 1

</llo_original>
